<compile_context>
chip_gen: v7x
topology: tpu7x:2x2x1
jax: 0.10.0
libtpu: 0.0.40
codegen_flags: <defaults>
</compile_context>

<pallas_src>
import functools

import jax
import jax.numpy as jnp
from jax.experimental import pallas as pl
from jax.experimental.pallas import tpu as pltpu

BN_EPS = 1e-5


def _round_up(x, m):
    return ((x + m - 1) // m) * m


def _stats_kernel(a_ref, w_ref, sum_ref, ssq_ref):
    # a_ref: (TILE_M, K_pad) bf16 im2col rows, w_ref: (K_pad, C_pad) bf16 weights.
    # sum_ref / ssq_ref: (1, C_pad) f32 accumulators, resident across the M grid.
    i = pl.program_id(0)
    y = jnp.dot(a_ref[...], w_ref[...], preferred_element_type=jnp.float32)

    @pl.when(i == 0)
    def _():
        sum_ref[...] = jnp.zeros_like(sum_ref)
        ssq_ref[...] = jnp.zeros_like(ssq_ref)

    sum_ref[...] += jnp.sum(y, axis=0, keepdims=True)
    ssq_ref[...] += jnp.sum(y * y, axis=0, keepdims=True)


def _matmul_affine_relu_kernel(a_ref, w_ref, scale_ref, shift_ref, o_ref):
    # Recompute the tile matmul (cheaper than round-tripping y through HBM for
    # small Cin) and apply the folded BatchNorm affine + ReLU in one FMA pass.
    y = jnp.dot(a_ref[...], w_ref[...], preferred_element_type=jnp.float32)
    o_ref[...] = jnp.maximum(
        y * scale_ref[...] + shift_ref[...], 0.0).astype(o_ref.dtype)


def _im2col_3d(x_ndhwc, stride):
    """Extract 3x3x3 patches (padding=1) from a channels-last 5D tensor."""
    N, D, H, W, C = x_ndhwc.shape
    xp = jnp.pad(x_ndhwc, ((0, 0), (1, 1), (1, 1), (1, 1), (0, 0)))
    Do = (D - 1) // stride + 1
    Ho = (H - 1) // stride + 1
    Wo = (W - 1) // stride + 1
    patches = []
    for kd in range(3):
        for kh in range(3):
            for kw in range(3):
                sl = xp[:,
                        kd:kd + stride * (Do - 1) + 1:stride,
                        kh:kh + stride * (Ho - 1) + 1:stride,
                        kw:kw + stride * (Wo - 1) + 1:stride, :]
                patches.append(sl)
    a = jnp.stack(patches, axis=-2)                  # (N, Do, Ho, Wo, 27, C)
    a = a.reshape(N * Do * Ho * Wo, 27 * C)
    return a, (N, Do, Ho, Wo)


def conv3x3_bn_relu(x_ndhwc, w_oihw, gamma, beta, stride):
    """One Conv3x3 block: Conv3d(k=3, pad=1, no bias) + BN(train stats) + ReLU."""
    c_out = w_oihw.shape[0]
    a, out_dims = _im2col_3d(x_ndhwc.astype(jnp.float32), stride)
    m, k = a.shape

    # Pad K (27*Cin) and Cout to multiples of 128 (MXU / lane friendly) and M to
    # a multiple of the row tile. Modest tiles keep the double-buffered working
    # set far below even v7x's 64 MiB VMEM.
    k_pad = _round_up(k, 128)
    c_pad = _round_up(c_out, 128)
    tile_m = 512 if m >= 512 else _round_up(m, 8)
    m_pad = _round_up(m, tile_m)
    num_tiles = m_pad // tile_m

    # bf16 operands (halves HBM traffic of the 27x-inflated A), f32 accumulation.
    a_p = jnp.pad(a, ((0, m_pad - m), (0, k_pad - k))).astype(jnp.bfloat16)
    # PyTorch weight (Cout, Cin, kD, kH, kW) -> (kD, kH, kW, Cin, Cout) -> (27*Cin, Cout)
    w2 = jnp.transpose(w_oihw, (2, 3, 4, 1, 0)).reshape(k, c_out).astype(jnp.float32)
    w_p = jnp.pad(w2, ((0, k_pad - k), (0, c_pad - c_out))).astype(jnp.bfloat16)
    g_p = jnp.pad(gamma.astype(jnp.float32), (0, c_pad - c_out)).reshape(1, c_pad)
    b_p = jnp.pad(beta.astype(jnp.float32), (0, c_pad - c_out)).reshape(1, c_pad)

    a_spec = pl.BlockSpec((tile_m, k_pad), lambda i: (i, 0))
    w_spec = pl.BlockSpec((k_pad, c_pad), lambda i: (0, 0))
    vec_spec = pl.BlockSpec((1, c_pad), lambda i: (0, 0))

    # Pass 1: tiled matmul + global per-channel sum / sum-of-squares.
    tot_sum, tot_ssq = pl.pallas_call(
        _stats_kernel,
        out_shape=(jax.ShapeDtypeStruct((1, c_pad), jnp.float32),
                   jax.ShapeDtypeStruct((1, c_pad), jnp.float32)),
        grid_spec=pltpu.PrefetchScalarGridSpec(
            num_scalar_prefetch=0,
            grid=(num_tiles,),
            in_specs=[a_spec, w_spec],
            out_specs=(vec_spec, vec_spec),
        ),
        compiler_params=pltpu.CompilerParams(
            dimension_semantics=("arbitrary",)),
    )(a_p, w_p)

    # BatchNorm3d training-mode statistics over all N*D*H*W positions (biased
    # variance, matching normalization in the PyTorch forward). Padded rows of
    # a_p are all-zero so they contribute nothing to either accumulator; we
    # divide by the true M. Fold gamma/beta into a single scale/shift.
    inv_m = 1.0 / float(m)
    mean = tot_sum * inv_m
    var = jnp.maximum(tot_ssq * inv_m - mean * mean, 0.0)
    inv_std = jax.lax.rsqrt(var + BN_EPS)
    scale = g_p * inv_std                      # padded channels: gamma=0 -> scale=0
    shift = b_p - mean * scale                 # padded channels: -> shift=0

    # Pass 2: tiled matmul + folded affine + ReLU; lane-dense 128-wide output.
    out = pl.pallas_call(
        _matmul_affine_relu_kernel,
        out_shape=jax.ShapeDtypeStruct((m_pad, c_pad), jnp.float32),
        grid_spec=pltpu.PrefetchScalarGridSpec(
            num_scalar_prefetch=0,
            grid=(num_tiles,),
            in_specs=[a_spec, w_spec, vec_spec, vec_spec],
            out_specs=pl.BlockSpec((tile_m, c_pad), lambda i: (i, 0)),
        ),
        compiler_params=pltpu.CompilerParams(
            dimension_semantics=("parallel",)),
    )(a_p, w_p, scale, shift)

    n, do, ho, wo = out_dims
    return out[:m, :c_out].reshape(n, do, ho, wo, c_out)


def init_encoder_params(key, in_channels, mid_channels, out_channels):
    """Deterministic parameter init matching the module's __init__ shapes."""
    k1, k2 = jax.random.split(key)
    fan1 = in_channels * 27
    fan2 = mid_channels * 27
    w1 = jax.random.normal(k1, (mid_channels, in_channels, 3, 3, 3),
                           jnp.float32) * (2.0 / fan1) ** 0.5
    w2 = jax.random.normal(k2, (out_channels, mid_channels, 3, 3, 3),
                           jnp.float32) * (2.0 / fan2) ** 0.5
    return {
        "w1": w1,
        "g1": jnp.ones((mid_channels,), jnp.float32),   # BN default init
        "b1": jnp.zeros((mid_channels,), jnp.float32),
        "w2": w2,
        "g2": jnp.ones((out_channels,), jnp.float32),
        "b2": jnp.zeros((out_channels,), jnp.float32),
    }


@functools.partial(jax.jit, static_argnames=("downconv",))
def encoder_forward(x_ncdhw, params, downconv=False):
    # layout: input is PyTorch NCDHW; kernel compute runs channels-last.
    x = jnp.transpose(x_ncdhw, (0, 2, 3, 4, 1))          # NCDHW -> NDHWC
    stride1 = 2 if downconv else 1
    x = conv3x3_bn_relu(x, params["w1"], params["g1"], params["b1"], stride1)
    x = conv3x3_bn_relu(x, params["w2"], params["g2"], params["b2"], 1)
    return jnp.transpose(x, (0, 4, 1, 2, 3))             # NDHWC -> NCDHW


if __name__ == "__main__":
    key = jax.random.PRNGKey(0)
    kx, kp = jax.random.split(key)

    # Small shapes consistent with Encoder's Conv3d forward (NCDHW, 5D).
    N, C_in, D, H, W = 2, 3, 8, 8, 8
    C_mid, C_out = 8, 16
    downconv = True   # conv1 stride 2 -> spatial halves; conv2 stride 1

    x = jax.random.normal(kx, (N, C_in, D, H, W), jnp.float32)
    params = init_encoder_params(kp, C_in, C_mid, C_out)

    y = encoder_forward(x, params, downconv=downconv)
    y = jax.block_until_ready(y)

    expected_spatial = (D // 2, H // 2, W // 2) if downconv else (D, H, W)
    assert y.shape == (N, C_out) + expected_spatial, y.shape
    assert bool(jnp.all(jnp.isfinite(y)))
    print("KERNEL_OK")
</pallas_src>

<mosaic_0001>
module attributes {stable_mosaic.version = 11 : i64} {
  func.func @_stats_kernel(%arg0: i32, %arg1: memref<128x128xbf16, #tpu.memory_space<vmem>>, %arg2: memref<128x128xbf16, #tpu.memory_space<vmem>>, %arg3: memref<1x128xf32, #tpu.memory_space<vmem>>, %arg4: memref<1x128xf32, #tpu.memory_space<vmem>>) attributes {dimension_semantics = [#tpu.dimension_semantics<arbitrary>], iteration_bounds = array<i64: 1>, scalar_prefetch = 0 : i64, scratch_operands = 0 : i64, tpu.core_type = #tpu.core_type<tc>, window_params = [{transform_indices = @transform_0, window_bounds = array<i64: 128, 128>}, {pipeline_mode = #tpu.pipeline_mode<synchronous>, transform_indices = @transform_1, window_bounds = array<i64: 128, 128>}, {pipeline_mode = #tpu.pipeline_mode<synchronous>, transform_indices = @transform_2, window_bounds = array<i64: 1, 128>}, {pipeline_mode = #tpu.pipeline_mode<synchronous>, transform_indices = @transform_3, window_bounds = array<i64: 1, 128>}]} {
    %c0 = arith.constant 0 : index
    %c0_0 = arith.constant 0 : index
    %0 = vector.load %arg1[%c0, %c0_0] : memref<128x128xbf16, #tpu.memory_space<vmem>>, vector<128x128xbf16>
    %c0_1 = arith.constant 0 : index
    %c0_2 = arith.constant 0 : index
    %1 = vector.load %arg2[%c0_1, %c0_2] : memref<128x128xbf16, #tpu.memory_space<vmem>>, vector<128x128xbf16>
    %cst = arith.constant dense<0.000000e+00> : vector<128x128xf32>
    %2 = tpu.matmul %0, %1, %cst {dimension_numbers = #tpu.dot_dimension_numbers<[1], [0], [0], [1], [0, 0, 1, 1], [], []>} : vector<128x128xbf16>, vector<128x128xbf16>, vector<128x128xf32> -> vector<128x128xf32>
    %c0_i32 = arith.constant 0 : i32
    %3 = arith.cmpi eq, %arg0, %c0_i32 : i32
    %4 = arith.extui %3 : i1 to i32
    %c0_i32_3 = arith.constant 0 : i32
    %5 = arith.cmpi ne, %4, %c0_i32_3 : i32
    scf.if %5 {
      %cst_14 = arith.constant 0.000000e+00 : f32
      %17 = vector.broadcast %cst_14 : f32 to vector<1x128xf32>
      %c0_15 = arith.constant 0 : index
      %c0_16 = arith.constant 0 : index
      %18 = vector.load %arg3[%c0_15, %c0_16] : memref<1x128xf32, #tpu.memory_space<vmem>>, vector<1x128xf32>
      tpu.vector_store %arg3[%c0_15, %c0_16], %17 {strides = array<i32>} : memref<1x128xf32, #tpu.memory_space<vmem>>, vector<1x128xf32>,
      %cst_17 = arith.constant 0.000000e+00 : f32
      %19 = vector.broadcast %cst_17 : f32 to vector<1x128xf32>
      %c0_18 = arith.constant 0 : index
      %c0_19 = arith.constant 0 : index
      %20 = vector.load %arg4[%c0_18, %c0_19] : memref<1x128xf32, #tpu.memory_space<vmem>>, vector<1x128xf32>
      tpu.vector_store %arg4[%c0_18, %c0_19], %19 {strides = array<i32>} : memref<1x128xf32, #tpu.memory_space<vmem>>, vector<1x128xf32>,
    } else {
    }
    %c0_4 = arith.constant 0 : index
    %c0_5 = arith.constant 0 : index
    %6 = vector.load %arg3[%c0_4, %c0_5] : memref<1x128xf32, #tpu.memory_space<vmem>>, vector<1x128xf32>
    %cst_6 = arith.constant dense<0.000000e+00> : vector<128xf32>
    %7 = vector.multi_reduction <add>, %2, %cst_6 [0] : vector<128x128xf32> to vector<128xf32>
    %8 = vector.shape_cast %7 : vector<128xf32> to vector<1x128xf32>
    %9 = arith.addf %6, %8 : vector<1x128xf32>
    %c0_7 = arith.constant 0 : index
    %c0_8 = arith.constant 0 : index
    %10 = vector.load %arg3[%c0_7, %c0_8] : memref<1x128xf32, #tpu.memory_space<vmem>>, vector<1x128xf32>
    tpu.vector_store %arg3[%c0_7, %c0_8], %9 {strides = array<i32>} : memref<1x128xf32, #tpu.memory_space<vmem>>, vector<1x128xf32>,
    %c0_9 = arith.constant 0 : index
    %c0_10 = arith.constant 0 : index
    %11 = vector.load %arg4[%c0_9, %c0_10] : memref<1x128xf32, #tpu.memory_space<vmem>>, vector<1x128xf32>
    %12 = arith.mulf %2, %2 : vector<128x128xf32>
    %cst_11 = arith.constant dense<0.000000e+00> : vector<128xf32>
    %13 = vector.multi_reduction <add>, %12, %cst_11 [0] : vector<128x128xf32> to vector<128xf32>
    %14 = vector.shape_cast %13 : vector<128xf32> to vector<1x128xf32>
    %15 = arith.addf %11, %14 : vector<1x128xf32>
    %c0_12 = arith.constant 0 : index
    %c0_13 = arith.constant 0 : index
    %16 = vector.load %arg4[%c0_12, %c0_13] : memref<1x128xf32, #tpu.memory_space<vmem>>, vector<1x128xf32>
    tpu.vector_store %arg4[%c0_12, %c0_13], %15 {strides = array<i32>} : memref<1x128xf32, #tpu.memory_space<vmem>>, vector<1x128xf32>,
    return
  }
  func.func @transform_0(%arg0: i32) -> (i32, i32) {
    %c0_i32 = arith.constant 0 : i32
    %c0_i32_0 = arith.constant 0 : i32
    return %arg0, %c0_i32 : i32, i32
  }
  func.func @transform_1(%arg0: i32) -> (i32, i32) {
    %c0_i32 = arith.constant 0 : i32
    %c0_i32_0 = arith.constant 0 : i32
    %c0_i32_1 = arith.constant 0 : i32
    return %c0_i32, %c0_i32_0 : i32, i32
  }
  func.func @transform_2(%arg0: i32) -> (i32, i32) {
    %c0_i32 = arith.constant 0 : i32
    %c0_i32_0 = arith.constant 0 : i32
    %c0_i32_1 = arith.constant 0 : i32
    return %c0_i32, %c0_i32_0 : i32, i32
  }
  func.func @transform_3(%arg0: i32) -> (i32, i32) {
    %c0_i32 = arith.constant 0 : i32
    %c0_i32_0 = arith.constant 0 : i32
    %c0_i32_1 = arith.constant 0 : i32
    return %c0_i32, %c0_i32_0 : i32, i32
  }
}

module attributes {stable_mosaic.version = 11 : i64} {
  func.func @_matmul_affine_relu_kernel(%arg0: i32, %arg1: memref<128x128xbf16, #tpu.memory_space<vmem>>, %arg2: memref<128x128xbf16, #tpu.memory_space<vmem>>, %arg3: memref<1x128xf32, #tpu.memory_space<vmem>>, %arg4: memref<1x128xf32, #tpu.memory_space<vmem>>, %arg5: memref<128x128xf32, #tpu.memory_space<vmem>>) attributes {dimension_semantics = [#tpu.dimension_semantics<parallel>], iteration_bounds = array<i64: 1>, scalar_prefetch = 0 : i64, scratch_operands = 0 : i64, tpu.core_type = #tpu.core_type<tc>, window_params = [{transform_indices = @transform_0, window_bounds = array<i64: 128, 128>}, {pipeline_mode = #tpu.pipeline_mode<synchronous>, transform_indices = @transform_1, window_bounds = array<i64: 128, 128>}, {pipeline_mode = #tpu.pipeline_mode<synchronous>, transform_indices = @transform_2, window_bounds = array<i64: 1, 128>}, {pipeline_mode = #tpu.pipeline_mode<synchronous>, transform_indices = @transform_3, window_bounds = array<i64: 1, 128>}, {transform_indices = @transform_4, window_bounds = array<i64: 128, 128>}]} {
    %c0 = arith.constant 0 : index
    %c0_0 = arith.constant 0 : index
    %0 = vector.load %arg1[%c0, %c0_0] : memref<128x128xbf16, #tpu.memory_space<vmem>>, vector<128x128xbf16>
    %c0_1 = arith.constant 0 : index
    %c0_2 = arith.constant 0 : index
    %1 = vector.load %arg2[%c0_1, %c0_2] : memref<128x128xbf16, #tpu.memory_space<vmem>>, vector<128x128xbf16>
    %cst = arith.constant dense<0.000000e+00> : vector<128x128xf32>
    %2 = tpu.matmul %0, %1, %cst {dimension_numbers = #tpu.dot_dimension_numbers<[1], [0], [0], [1], [0, 0, 1, 1], [], []>} : vector<128x128xbf16>, vector<128x128xbf16>, vector<128x128xf32> -> vector<128x128xf32>
    %c0_3 = arith.constant 0 : index
    %c0_4 = arith.constant 0 : index
    %3 = vector.load %arg3[%c0_3, %c0_4] : memref<1x128xf32, #tpu.memory_space<vmem>>, vector<1x128xf32>
    %4 = vector.broadcast %3 : vector<1x128xf32> to vector<128x128xf32>
    %5 = arith.mulf %2, %4 : vector<128x128xf32>
    %c0_5 = arith.constant 0 : index
    %c0_6 = arith.constant 0 : index
    %6 = vector.load %arg4[%c0_5, %c0_6] : memref<1x128xf32, #tpu.memory_space<vmem>>, vector<1x128xf32>
    %7 = vector.broadcast %6 : vector<1x128xf32> to vector<128x128xf32>
    %8 = arith.addf %5, %7 : vector<128x128xf32>
    %cst_7 = arith.constant 0.000000e+00 : f32
    %9 = vector.broadcast %cst_7 : f32 to vector<128x128xf32>
    %10 = arith.maximumf %8, %9 : vector<128x128xf32>
    %c0_8 = arith.constant 0 : index
    %c0_9 = arith.constant 0 : index
    %11 = vector.load %arg5[%c0_8, %c0_9] : memref<128x128xf32, #tpu.memory_space<vmem>>, vector<128x128xf32>
    tpu.vector_store %arg5[%c0_8, %c0_9], %10 {strides = array<i32>} : memref<128x128xf32, #tpu.memory_space<vmem>>, vector<128x128xf32>,
    return
  }
  func.func @transform_0(%arg0: i32) -> (i32, i32) {
    %c0_i32 = arith.constant 0 : i32
    %c0_i32_0 = arith.constant 0 : i32
    return %arg0, %c0_i32 : i32, i32
  }
  func.func @transform_1(%arg0: i32) -> (i32, i32) {
    %c0_i32 = arith.constant 0 : i32
    %c0_i32_0 = arith.constant 0 : i32
    %c0_i32_1 = arith.constant 0 : i32
    return %c0_i32, %c0_i32_0 : i32, i32
  }
  func.func @transform_2(%arg0: i32) -> (i32, i32) {
    %c0_i32 = arith.constant 0 : i32
    %c0_i32_0 = arith.constant 0 : i32
    %c0_i32_1 = arith.constant 0 : i32
    return %c0_i32, %c0_i32_0 : i32, i32
  }
  func.func @transform_3(%arg0: i32) -> (i32, i32) {
    %c0_i32 = arith.constant 0 : i32
    %c0_i32_0 = arith.constant 0 : i32
    %c0_i32_1 = arith.constant 0 : i32
    return %c0_i32, %c0_i32_0 : i32, i32
  }
  func.func @transform_4(%arg0: i32) -> (i32, i32) {
    %c0_i32 = arith.constant 0 : i32
    %c0_i32_0 = arith.constant 0 : i32
    return %arg0, %c0_i32 : i32, i32
  }
}

module attributes {stable_mosaic.version = 11 : i64} {
  func.func @_stats_kernel(%arg0: i32, %arg1: memref<128x256xbf16, #tpu.memory_space<vmem>>, %arg2: memref<256x128xbf16, #tpu.memory_space<vmem>>, %arg3: memref<1x128xf32, #tpu.memory_space<vmem>>, %arg4: memref<1x128xf32, #tpu.memory_space<vmem>>) attributes {dimension_semantics = [#tpu.dimension_semantics<arbitrary>], iteration_bounds = array<i64: 1>, scalar_prefetch = 0 : i64, scratch_operands = 0 : i64, tpu.core_type = #tpu.core_type<tc>, window_params = [{transform_indices = @transform_0, window_bounds = array<i64: 128, 256>}, {pipeline_mode = #tpu.pipeline_mode<synchronous>, transform_indices = @transform_1, window_bounds = array<i64: 256, 128>}, {pipeline_mode = #tpu.pipeline_mode<synchronous>, transform_indices = @transform_2, window_bounds = array<i64: 1, 128>}, {pipeline_mode = #tpu.pipeline_mode<synchronous>, transform_indices = @transform_3, window_bounds = array<i64: 1, 128>}]} {
    %c0 = arith.constant 0 : index
    %c0_0 = arith.constant 0 : index
    %0 = vector.load %arg1[%c0, %c0_0] : memref<128x256xbf16, #tpu.memory_space<vmem>>, vector<128x256xbf16>
    %c0_1 = arith.constant 0 : index
    %c0_2 = arith.constant 0 : index
    %1 = vector.load %arg2[%c0_1, %c0_2] : memref<256x128xbf16, #tpu.memory_space<vmem>>, vector<256x128xbf16>
    %cst = arith.constant dense<0.000000e+00> : vector<128x128xf32>
    %2 = tpu.matmul %0, %1, %cst {dimension_numbers = #tpu.dot_dimension_numbers<[1], [0], [0], [1], [0, 0, 1, 1], [], []>} : vector<128x256xbf16>, vector<256x128xbf16>, vector<128x128xf32> -> vector<128x128xf32>
    %c0_i32 = arith.constant 0 : i32
    %3 = arith.cmpi eq, %arg0, %c0_i32 : i32
    %4 = arith.extui %3 : i1 to i32
    %c0_i32_3 = arith.constant 0 : i32
    %5 = arith.cmpi ne, %4, %c0_i32_3 : i32
    scf.if %5 {
      %cst_14 = arith.constant 0.000000e+00 : f32
      %17 = vector.broadcast %cst_14 : f32 to vector<1x128xf32>
      %c0_15 = arith.constant 0 : index
      %c0_16 = arith.constant 0 : index
      %18 = vector.load %arg3[%c0_15, %c0_16] : memref<1x128xf32, #tpu.memory_space<vmem>>, vector<1x128xf32>
      tpu.vector_store %arg3[%c0_15, %c0_16], %17 {strides = array<i32>} : memref<1x128xf32, #tpu.memory_space<vmem>>, vector<1x128xf32>,
      %cst_17 = arith.constant 0.000000e+00 : f32
      %19 = vector.broadcast %cst_17 : f32 to vector<1x128xf32>
      %c0_18 = arith.constant 0 : index
      %c0_19 = arith.constant 0 : index
      %20 = vector.load %arg4[%c0_18, %c0_19] : memref<1x128xf32, #tpu.memory_space<vmem>>, vector<1x128xf32>
      tpu.vector_store %arg4[%c0_18, %c0_19], %19 {strides = array<i32>} : memref<1x128xf32, #tpu.memory_space<vmem>>, vector<1x128xf32>,
    } else {
    }
    %c0_4 = arith.constant 0 : index
    %c0_5 = arith.constant 0 : index
    %6 = vector.load %arg3[%c0_4, %c0_5] : memref<1x128xf32, #tpu.memory_space<vmem>>, vector<1x128xf32>
    %cst_6 = arith.constant dense<0.000000e+00> : vector<128xf32>
    %7 = vector.multi_reduction <add>, %2, %cst_6 [0] : vector<128x128xf32> to vector<128xf32>
    %8 = vector.shape_cast %7 : vector<128xf32> to vector<1x128xf32>
    %9 = arith.addf %6, %8 : vector<1x128xf32>
    %c0_7 = arith.constant 0 : index
    %c0_8 = arith.constant 0 : index
    %10 = vector.load %arg3[%c0_7, %c0_8] : memref<1x128xf32, #tpu.memory_space<vmem>>, vector<1x128xf32>
    tpu.vector_store %arg3[%c0_7, %c0_8], %9 {strides = array<i32>} : memref<1x128xf32, #tpu.memory_space<vmem>>, vector<1x128xf32>,
    %c0_9 = arith.constant 0 : index
    %c0_10 = arith.constant 0 : index
    %11 = vector.load %arg4[%c0_9, %c0_10] : memref<1x128xf32, #tpu.memory_space<vmem>>, vector<1x128xf32>
    %12 = arith.mulf %2, %2 : vector<128x128xf32>
    %cst_11 = arith.constant dense<0.000000e+00> : vector<128xf32>
    %13 = vector.multi_reduction <add>, %12, %cst_11 [0] : vector<128x128xf32> to vector<128xf32>
    %14 = vector.shape_cast %13 : vector<128xf32> to vector<1x128xf32>
    %15 = arith.addf %11, %14 : vector<1x128xf32>
    %c0_12 = arith.constant 0 : index
    %c0_13 = arith.constant 0 : index
    %16 = vector.load %arg4[%c0_12, %c0_13] : memref<1x128xf32, #tpu.memory_space<vmem>>, vector<1x128xf32>
    tpu.vector_store %arg4[%c0_12, %c0_13], %15 {strides = array<i32>} : memref<1x128xf32, #tpu.memory_space<vmem>>, vector<1x128xf32>,
    return
  }
  func.func @transform_0(%arg0: i32) -> (i32, i32) {
    %c0_i32 = arith.constant 0 : i32
    %c0_i32_0 = arith.constant 0 : i32
    return %arg0, %c0_i32 : i32, i32
  }
  func.func @transform_1(%arg0: i32) -> (i32, i32) {
    %c0_i32 = arith.constant 0 : i32
    %c0_i32_0 = arith.constant 0 : i32
    %c0_i32_1 = arith.constant 0 : i32
    return %c0_i32, %c0_i32_0 : i32, i32
  }
  func.func @transform_2(%arg0: i32) -> (i32, i32) {
    %c0_i32 = arith.constant 0 : i32
    %c0_i32_0 = arith.constant 0 : i32
    %c0_i32_1 = arith.constant 0 : i32
    return %c0_i32, %c0_i32_0 : i32, i32
  }
  func.func @transform_3(%arg0: i32) -> (i32, i32) {
    %c0_i32 = arith.constant 0 : i32
    %c0_i32_0 = arith.constant 0 : i32
    %c0_i32_1 = arith.constant 0 : i32
    return %c0_i32, %c0_i32_0 : i32, i32
  }
}

module attributes {stable_mosaic.version = 11 : i64} {
  func.func @_matmul_affine_relu_kernel(%arg0: i32, %arg1: memref<128x256xbf16, #tpu.memory_space<vmem>>, %arg2: memref<256x128xbf16, #tpu.memory_space<vmem>>, %arg3: memref<1x128xf32, #tpu.memory_space<vmem>>, %arg4: memref<1x128xf32, #tpu.memory_space<vmem>>, %arg5: memref<128x128xf32, #tpu.memory_space<vmem>>) attributes {dimension_semantics = [#tpu.dimension_semantics<parallel>], iteration_bounds = array<i64: 1>, scalar_prefetch = 0 : i64, scratch_operands = 0 : i64, tpu.core_type = #tpu.core_type<tc>, window_params = [{transform_indices = @transform_0, window_bounds = array<i64: 128, 256>}, {pipeline_mode = #tpu.pipeline_mode<synchronous>, transform_indices = @transform_1, window_bounds = array<i64: 256, 128>}, {pipeline_mode = #tpu.pipeline_mode<synchronous>, transform_indices = @transform_2, window_bounds = array<i64: 1, 128>}, {pipeline_mode = #tpu.pipeline_mode<synchronous>, transform_indices = @transform_3, window_bounds = array<i64: 1, 128>}, {transform_indices = @transform_4, window_bounds = array<i64: 128, 128>}]} {
    %c0 = arith.constant 0 : index
    %c0_0 = arith.constant 0 : index
    %0 = vector.load %arg1[%c0, %c0_0] : memref<128x256xbf16, #tpu.memory_space<vmem>>, vector<128x256xbf16>
    %c0_1 = arith.constant 0 : index
    %c0_2 = arith.constant 0 : index
    %1 = vector.load %arg2[%c0_1, %c0_2] : memref<256x128xbf16, #tpu.memory_space<vmem>>, vector<256x128xbf16>
    %cst = arith.constant dense<0.000000e+00> : vector<128x128xf32>
    %2 = tpu.matmul %0, %1, %cst {dimension_numbers = #tpu.dot_dimension_numbers<[1], [0], [0], [1], [0, 0, 1, 1], [], []>} : vector<128x256xbf16>, vector<256x128xbf16>, vector<128x128xf32> -> vector<128x128xf32>
    %c0_3 = arith.constant 0 : index
    %c0_4 = arith.constant 0 : index
    %3 = vector.load %arg3[%c0_3, %c0_4] : memref<1x128xf32, #tpu.memory_space<vmem>>, vector<1x128xf32>
    %4 = vector.broadcast %3 : vector<1x128xf32> to vector<128x128xf32>
    %5 = arith.mulf %2, %4 : vector<128x128xf32>
    %c0_5 = arith.constant 0 : index
    %c0_6 = arith.constant 0 : index
    %6 = vector.load %arg4[%c0_5, %c0_6] : memref<1x128xf32, #tpu.memory_space<vmem>>, vector<1x128xf32>
    %7 = vector.broadcast %6 : vector<1x128xf32> to vector<128x128xf32>
    %8 = arith.addf %5, %7 : vector<128x128xf32>
    %cst_7 = arith.constant 0.000000e+00 : f32
    %9 = vector.broadcast %cst_7 : f32 to vector<128x128xf32>
    %10 = arith.maximumf %8, %9 : vector<128x128xf32>
    %c0_8 = arith.constant 0 : index
    %c0_9 = arith.constant 0 : index
    %11 = vector.load %arg5[%c0_8, %c0_9] : memref<128x128xf32, #tpu.memory_space<vmem>>, vector<128x128xf32>
    tpu.vector_store %arg5[%c0_8, %c0_9], %10 {strides = array<i32>} : memref<128x128xf32, #tpu.memory_space<vmem>>, vector<128x128xf32>,
    return
  }
  func.func @transform_0(%arg0: i32) -> (i32, i32) {
    %c0_i32 = arith.constant 0 : i32
    %c0_i32_0 = arith.constant 0 : i32
    return %arg0, %c0_i32 : i32, i32
  }
  func.func @transform_1(%arg0: i32) -> (i32, i32) {
    %c0_i32 = arith.constant 0 : i32
    %c0_i32_0 = arith.constant 0 : i32
    %c0_i32_1 = arith.constant 0 : i32
    return %c0_i32, %c0_i32_0 : i32, i32
  }
  func.func @transform_2(%arg0: i32) -> (i32, i32) {
    %c0_i32 = arith.constant 0 : i32
    %c0_i32_0 = arith.constant 0 : i32
    %c0_i32_1 = arith.constant 0 : i32
    return %c0_i32, %c0_i32_0 : i32, i32
  }
  func.func @transform_3(%arg0: i32) -> (i32, i32) {
    %c0_i32 = arith.constant 0 : i32
    %c0_i32_0 = arith.constant 0 : i32
    %c0_i32_1 = arith.constant 0 : i32
    return %c0_i32, %c0_i32_0 : i32, i32
  }
  func.func @transform_4(%arg0: i32) -> (i32, i32) {
    %c0_i32 = arith.constant 0 : i32
    %c0_i32_0 = arith.constant 0 : i32
    return %arg0, %c0_i32 : i32, i32
  }
}

</mosaic_0001>

<llo_original>
// kernel: encoder_forward.4
$region0: #{encoder_forward.4}
  #allocation0 [shape = 'u32[]', space=smem, size = 0x4, offset = 0x4, fixed_abs, tag = 'smem constant byte address 0x4 - core index']
  #allocation1 [shape = 'u32[144,128]{1,0:T(1,128)}', space=vmem, size = 0x12000, scoped, tag = 'internal scratch']
  %s0 = inlined_call_operand.vmem [shape: bf16[128,128], index: 0, kind: input, shape index: {}]
  %s1 = inlined_call_operand.vmem [shape: bf16[128,128], index: 1, kind: input, shape index: {}]
  %s2 = inlined_call_operand.vmem [shape: f32[1,128], index: 2, kind: output, shape index: {0}]
  %s3 = inlined_call_operand.vmem [shape: f32[1,128], index: 3, kind: output, shape index: {1}]
  %4 = xla_tuple %s2, %s3
  %s5 = sld [smem:[#allocation0]]
  $region30: #{encoder_forward.4} parent=0
    _
  %s7 = ssub.s32 1, %s5
  %s8 = scalar_select 0, %s7, %s5
  // Predicated region
  $region2: #{encoder_forward.4} parent=0 // pred_check
    _
  $region3: #{encoder_forward.4} parent=0 // pred_check_branch
    %10 = sbr.rel (0) target = $region5
  $region4: #{encoder_forward.4} parent=0 // pred_region
    _
  $region5: #{encoder_forward.4} parent=0 // pred_fallthru
    _
  // Predicated region
  $region6: #{encoder_forward.4} parent=0 // pred_check
    _
  $region7: #{encoder_forward.4} parent=0 // pred_check_branch
    %12 = sbr.rel (0) target = $region9
  $region8: #{encoder_forward.4} parent=0 // pred_region
    _
  $region9: #{encoder_forward.4} parent=0 // pred_fallthru
    _
  %v14 = vld [vmem:[%s0] sm:$0xf]
  %v15 = vld [vmem:[%s0 + $0x4] sm:$0xf]
  %v16 = vld [vmem:[%s0 + $0x8] sm:$0xf]
  %v17 = vld [vmem:[%s0 + $0xc] sm:$0xf]
  %v18 = vld [vmem:[%s0 + $0x10] sm:$0xf]
  %v19 = vld [vmem:[%s0 + $0x14] sm:$0xf]
  %v20 = vld [vmem:[%s0 + $0x18] sm:$0xf]
  %v21 = vld [vmem:[%s0 + $0x1c] sm:$0xf]
  %v22 = vld [vmem:[%s0 + $0x20] sm:$0xf]
  %v23 = vld [vmem:[%s0 + $0x24] sm:$0xf]
  %v24 = vld [vmem:[%s0 + $0x28] sm:$0xf]
  %v25 = vld [vmem:[%s0 + $0x2c] sm:$0xf]
  %v26 = vld [vmem:[%s0 + $0x30] sm:$0xf]
  %v27 = vld [vmem:[%s0 + $0x34] sm:$0xf]
  %v28 = vld [vmem:[%s0 + $0x38] sm:$0xf]
  %v29 = vld [vmem:[%s0 + $0x3c] sm:$0xf]
  %v30 = vld [vmem:[%s1] sm:$0xf]
  %v31 = vld [vmem:[%s1 + $0x4] sm:$0xf]
  %v32 = vld [vmem:[%s1 + $0x8] sm:$0xf]
  %v33 = vld [vmem:[%s1 + $0xc] sm:$0xf]
  %v34 = vld [vmem:[%s1 + $0x10] sm:$0xf]
  %v35 = vld [vmem:[%s1 + $0x14] sm:$0xf]
  %v36 = vld [vmem:[%s1 + $0x18] sm:$0xf]
  %v37 = vld [vmem:[%s1 + $0x1c] sm:$0xf]
  %v38 = vld [vmem:[%s1 + $0x20] sm:$0xf]
  %v39 = vld [vmem:[%s1 + $0x24] sm:$0xf]
  %v40 = vld [vmem:[%s1 + $0x28] sm:$0xf]
  %v41 = vld [vmem:[%s1 + $0x2c] sm:$0xf]
  %v42 = vld [vmem:[%s1 + $0x30] sm:$0xf]
  %v43 = vld [vmem:[%s1 + $0x34] sm:$0xf]
  %v44 = vld [vmem:[%s1 + $0x38] sm:$0xf]
  %v45 = vld [vmem:[%s1 + $0x3c] sm:$0xf]
  %v62 = vunpack.c.l.b16 %v14
  %v63 = vunpack.c.l.b16 %v15
  %v64 = vunpack.c.l.b16 %v16
  %v65 = vunpack.c.l.b16 %v17
  %v66 = vunpack.c.l.b16 %v18
  %v67 = vunpack.c.l.b16 %v19
  %v68 = vunpack.c.l.b16 %v20
  %v69 = vunpack.c.l.b16 %v21
  %v70 = vunpack.c.l.b16 %v22
  %v71 = vunpack.c.l.b16 %v23
  %v72 = vunpack.c.l.b16 %v24
  %v73 = vunpack.c.l.b16 %v25
  %v74 = vunpack.c.l.b16 %v26
  %v75 = vunpack.c.l.b16 %v27
  %v76 = vunpack.c.l.b16 %v28
  %v77 = vunpack.c.l.b16 %v29
  %v78 = vpack.c.b16 %v63, %v62
  %v79 = vpack.c.b16 %v65, %v64
  %v80 = vpack.c.b16 %v67, %v66
  %v81 = vpack.c.b16 %v69, %v68
  %v82 = vpack.c.b16 %v71, %v70
  %v83 = vpack.c.b16 %v73, %v72
  %v84 = vpack.c.b16 %v75, %v74
  %v85 = vpack.c.b16 %v77, %v76
  %v110 = vunpack.c.l.b16 %v30
  %v111 = vunpack.c.l.b16 %v31
  %v112 = vunpack.c.l.b16 %v32
  %v113 = vunpack.c.l.b16 %v33
  %v114 = vunpack.c.l.b16 %v34
  %v115 = vunpack.c.l.b16 %v35
  %v116 = vunpack.c.l.b16 %v36
  %v117 = vunpack.c.l.b16 %v37
  %v118 = vunpack.c.l.b16 %v38
  %v119 = vunpack.c.l.b16 %v39
  %v120 = vunpack.c.l.b16 %v40
  %v121 = vunpack.c.l.b16 %v41
  %v122 = vunpack.c.l.b16 %v42
  %v123 = vunpack.c.l.b16 %v43
  %v124 = vunpack.c.l.b16 %v44
  %v125 = vunpack.c.l.b16 %v45
  %v126 = vpack.c.b16 %v111, %v110
  %v127 = vpack.c.b16 %v113, %v112
  %v128 = vpack.c.b16 %v115, %v114
  %v129 = vpack.c.b16 %v117, %v116
  %v130 = vpack.c.b16 %v119, %v118
  %v131 = vpack.c.b16 %v121, %v120
  %v132 = vpack.c.b16 %v123, %v122
  %v133 = vpack.c.b16 %v125, %v124
  %142 = vmatprep.subr.bf16.mxu0 0
  %143 = vmatpush1.bf16.msra.mxu0 %v126
  %144 = vmatprep.subr.bf16.mxu0 0
  %145 = vmatpush1.bf16.msra.mxu0 %v127
  %146 = vmatprep.subr.bf16.mxu0 0
  %147 = vmatpush1.bf16.msra.mxu0 %v128
  %148 = vmatprep.subr.bf16.mxu0 0
  %149 = vmatpush1.bf16.msra.mxu0 %v129
  %150 = vmatprep.subr.bf16.mxu0 0
  %151 = vmatpush1.bf16.msra.mxu0 %v130
  %152 = vmatprep.subr.bf16.mxu0 0
  %153 = vmatpush1.bf16.msra.mxu0 %v131
  %154 = vmatprep.subr.bf16.mxu0 0
  %155 = vmatpush1.bf16.msra.mxu0 %v132
  %156 = vmatprep.subr.bf16.mxu0 0
  %157 = vmatpush1.bf16.msra.mxu0 %v133
  %158 = vmatprep.subr.bf16.mxu0 0
  %159 = vmatpush1.bf16.msra.mxu0 0
  %160 = vmatprep.subr.bf16.mxu0 0
  %161 = vmatpush1.bf16.msra.mxu0 0
  %162 = vmatprep.subr.bf16.mxu0 0
  %163 = vmatpush1.bf16.msra.mxu0 0
  %164 = vmatprep.subr.bf16.mxu0 0
  %165 = vmatpush1.bf16.msra.mxu0 0
  %166 = vmatprep.subr.bf16.mxu0 0
  %167 = vmatpush1.bf16.msra.mxu0 0
  %168 = vmatprep.subr.bf16.mxu0 0
  %169 = vmatpush1.bf16.msra.mxu0 0
  %170 = vmatprep.subr.bf16.mxu0 0
  %171 = vmatpush1.bf16.msra.mxu0 0
  %172 = vmatprep.subr.bf16.mxu0 0
  %173 = vmatpush1.bf16.msra.mxu0 0
  %174 = vmatprep.mubr.bf16.mxu0 0
  %175 = vmatmul.mubr.bf16.gmra.mrb[0].mxu0 %v78
  %v176 = vpop.f32.mrb[0].mxu0
  %v177 = vadd.f32 0.0, %v176
  %v178 = vpop.f32.mrb[0].mxu0
  %v179 = vpop.f32.mrb[0].mxu0
  %v180 = vadd.f32 0.0, %v179
  %v181 = vpop.f32.mrb[0].mxu0
  %182 = vmatprep.mubr.bf16.mxu0 0
  %183 = vmatmul.mubr.bf16.gmra.mrb[0].mxu0 %v79
  %v184 = vpop.f32.mrb[0].mxu0
  %v185 = vadd.f32 0.0, %v184
  %v186 = vpop.f32.mrb[0].mxu0
  %v187 = vpop.f32.mrb[0].mxu0
  %v188 = vadd.f32 0.0, %v187
  %v189 = vpop.f32.mrb[0].mxu0
  %190 = vmatprep.mubr.bf16.mxu0 0
  %191 = vmatmul.mubr.bf16.gmra.mrb[0].mxu0 %v80
  %v192 = vpop.f32.mrb[0].mxu0
  %v193 = vadd.f32 0.0, %v192
  %v194 = vpop.f32.mrb[0].mxu0
  %v195 = vpop.f32.mrb[0].mxu0
  %v196 = vadd.f32 0.0, %v195
  %v197 = vpop.f32.mrb[0].mxu0
  %198 = vmatprep.mubr.bf16.mxu0 0
  %199 = vmatmul.mubr.bf16.gmra.mrb[0].mxu0 %v81
  %v200 = vpop.f32.mrb[0].mxu0
  %v201 = vadd.f32 0.0, %v200
  %v202 = vpop.f32.mrb[0].mxu0
  %v203 = vpop.f32.mrb[0].mxu0
  %v204 = vadd.f32 0.0, %v203
  %v205 = vpop.f32.mrb[0].mxu0
  %206 = vmatprep.mubr.bf16.mxu0 0
  %207 = vmatmul.mubr.bf16.gmra.mrb[0].mxu0 %v82
  %v208 = vpop.f32.mrb[0].mxu0
  %v209 = vadd.f32 0.0, %v208
  %v210 = vpop.f32.mrb[0].mxu0
  %v211 = vpop.f32.mrb[0].mxu0
  %v212 = vadd.f32 0.0, %v211
  %v213 = vpop.f32.mrb[0].mxu0
  %214 = vmatprep.mubr.bf16.mxu0 0
  %215 = vmatmul.mubr.bf16.gmra.mrb[0].mxu0 %v83
  %v216 = vpop.f32.mrb[0].mxu0
  %v217 = vadd.f32 0.0, %v216
  %v218 = vpop.f32.mrb[0].mxu0
  %v219 = vpop.f32.mrb[0].mxu0
  %v220 = vadd.f32 0.0, %v219
  %v221 = vpop.f32.mrb[0].mxu0
  %222 = vmatprep.mubr.bf16.mxu0 0
  %223 = vmatmul.mubr.bf16.gmra.mrb[0].mxu0 %v84
  %v224 = vpop.f32.mrb[0].mxu0
  %v225 = vadd.f32 0.0, %v224
  %v226 = vpop.f32.mrb[0].mxu0
  %v227 = vpop.f32.mrb[0].mxu0
  %v228 = vadd.f32 0.0, %v227
  %v229 = vpop.f32.mrb[0].mxu0
  %230 = vmatprep.mubr.bf16.mxu0 0
  %231 = vmatmul.mubr.bf16.gmra.mrb[0].mxu0 %v85
  %v232 = vpop.f32.mrb[0].mxu0
  %v233 = vadd.f32 0.0, %v232
  %v234 = vpop.f32.mrb[0].mxu0
  %v235 = vpop.f32.mrb[0].mxu0
  %v236 = vadd.f32 0.0, %v235
  %v237 = vpop.f32.mrb[0].mxu0
  %238 = vdwg.mxu0
  %p239 = scmp.eq.s32.totalorder 0, 0
  // Predicated region
  $region10: #{encoder_forward.4} parent=0 // pred_check
    %p240 = pneg %p239
  $region11: #{encoder_forward.4} parent=0 // pred_check_branch
    %242 = sbr.rel (%p240) target = $region13
  $region12: #{encoder_forward.4} parent=0 // pred_region
    %243 = vst [vmem:[%s2] sm:$0x1] 0.0
    %244 = vst [vmem:[%s3] sm:$0x1] 0.0
  $region13: #{encoder_forward.4} parent=0 // pred_fallthru
    _
  %v245 = vld [vmem:[%s2] sm:$0x1]
  %v246 = vadd.f32 %v177, %v180
  %v247 = vadd.f32 %v246, %v185
  %v248 = vadd.f32 %v247, %v188
  %v249 = vadd.f32 %v248, %v193
  %v250 = vadd.f32 %v249, %v196
  %v251 = vadd.f32 %v250, %v201
  %v252 = vadd.f32 %v251, %v204
  %v253 = vadd.f32 %v252, %v209
  %v254 = vadd.f32 %v253, %v212
  %v255 = vadd.f32 %v254, %v217
  %v256 = vadd.f32 %v255, %v220
  %v257 = vadd.f32 %v256, %v225
  %v258 = vadd.f32 %v257, %v228
  %v259 = vadd.f32 %v258, %v233
  %v260 = vadd.f32 %v259, %v236
  %v261 = vrot.slane %v260, 4
  %v262 = vadd.f32 %v260, %v261
  %v263 = vrot.slane %v262, 2
  %v264 = vadd.f32 %v262, %v263
  %v265 = vrot.slane %v264, 1
  %v266 = vadd.f32 %v264, %v265
  %v267 = vadd.f32 %v245, %v266
  %268 = vst [vmem:[%s2] sm:$0x1] %v267
  %v269 = vld [vmem:[%s3] sm:$0x1]
  %v270 = vmul.f32 %v177, %v177
  %v271 = vmul.f32 %v180, %v180
  %v272 = vmul.f32 %v185, %v185
  %v273 = vmul.f32 %v188, %v188
  %v274 = vmul.f32 %v193, %v193
  %v275 = vmul.f32 %v196, %v196
  %v276 = vmul.f32 %v201, %v201
  %v277 = vmul.f32 %v204, %v204
  %v278 = vmul.f32 %v209, %v209
  %v279 = vmul.f32 %v212, %v212
  %v280 = vmul.f32 %v217, %v217
  %v281 = vmul.f32 %v220, %v220
  %v282 = vmul.f32 %v225, %v225
  %v283 = vmul.f32 %v228, %v228
  %v284 = vmul.f32 %v233, %v233
  %v285 = vmul.f32 %v236, %v236
  %v286 = vadd.f32 %v270, %v271
  %v287 = vadd.f32 %v286, %v272
  %v288 = vadd.f32 %v287, %v273
  %v289 = vadd.f32 %v288, %v274
  %v290 = vadd.f32 %v289, %v275
  %v291 = vadd.f32 %v290, %v276
  %v292 = vadd.f32 %v291, %v277
  %v293 = vadd.f32 %v292, %v278
  %v294 = vadd.f32 %v293, %v279
  %v295 = vadd.f32 %v294, %v280
  %v296 = vadd.f32 %v295, %v281
  %v297 = vadd.f32 %v296, %v282
  %v298 = vadd.f32 %v297, %v283
  %v299 = vadd.f32 %v298, %v284
  %v300 = vadd.f32 %v299, %v285
  %v301 = vrot.slane %v300, 4
  %v302 = vadd.f32 %v300, %v301
  %v303 = vrot.slane %v302, 2
  %v304 = vadd.f32 %v302, %v303
  %v305 = vrot.slane %v304, 1
  %v306 = vadd.f32 %v304, %v305
  %v307 = vadd.f32 %v269, %v306
  %308 = vst [vmem:[%s3] sm:$0x1] %v307
  // Predicated region
  $region14: #{encoder_forward.4} parent=0 // pred_check
    _
  $region15: #{encoder_forward.4} parent=0 // pred_check_branch
    %310 = sbr.rel (0) target = $region17
  $region16: #{encoder_forward.4} parent=0 // pred_region
    _
  $region17: #{encoder_forward.4} parent=0 // pred_fallthru
    _
  // Predicated region
  $region18: #{encoder_forward.4} parent=0 // pred_check
    _
  $region19: #{encoder_forward.4} parent=0 // pred_check_branch
    %312 = sbr.rel (0) target = $region21
  $region20: #{encoder_forward.4} parent=0 // pred_region
    _
  $region21: #{encoder_forward.4} parent=0 // pred_fallthru
    _
  // Predicated region
  $region22: #{encoder_forward.4} parent=0 // pred_check
    _
  $region23: #{encoder_forward.4} parent=0 // pred_check_branch
    %314 = sbr.rel (0) target = $region25
  $region24: #{encoder_forward.4} parent=0 // pred_region
    _
  $region25: #{encoder_forward.4} parent=0 // pred_fallthru
    _
  // Predicated region
  $region26: #{encoder_forward.4} parent=0 // pred_check
    _
  $region27: #{encoder_forward.4} parent=0 // pred_check_branch
    %316 = sbr.rel (0) target = $region29
  $region28: #{encoder_forward.4} parent=0 // pred_region
    _
  $region29: #{encoder_forward.4} parent=0 // pred_fallthru
    _

// kernel: encoder_forward.5
$region0: #{encoder_forward.5}
  #allocation0 [shape = 'u32[]', space=smem, size = 0x4, offset = 0x4, fixed_abs, tag = 'smem constant byte address 0x4 - core index']
  #allocation1 [shape = 'u32[144,128]{1,0:T(1,128)}', space=vmem, size = 0x12000, scoped, tag = 'internal scratch']
  %s0 = inlined_call_operand.vmem [shape: bf16[128,128], index: 0, kind: input, shape index: {}]
  %s1 = inlined_call_operand.vmem [shape: bf16[128,128], index: 1, kind: input, shape index: {}]
  %s2 = inlined_call_operand.vmem [shape: f32[1,128], index: 2, kind: input, shape index: {}]
  %s3 = inlined_call_operand.vmem [shape: f32[1,128], index: 3, kind: input, shape index: {}]
  %s4 = inlined_call_operand.vmem [shape: f32[128,128], index: 4, kind: output, shape index: {}]
  %s5 = sld [smem:[#allocation0]]
  $region26: #{encoder_forward.5} parent=0
    _
  %s7 = ssub.s32 1, %s5
  %s8 = scalar_select 0, %s7, %s5
  // Predicated region
  $region2: #{encoder_forward.5} parent=0 // pred_check
    _
  $region3: #{encoder_forward.5} parent=0 // pred_check_branch
    %10 = sbr.rel (0) target = $region5
  $region4: #{encoder_forward.5} parent=0 // pred_region
    _
  $region5: #{encoder_forward.5} parent=0 // pred_fallthru
    _
  // Predicated region
  $region6: #{encoder_forward.5} parent=0 // pred_check
    _
  $region7: #{encoder_forward.5} parent=0 // pred_check_branch
    %12 = sbr.rel (0) target = $region9
  $region8: #{encoder_forward.5} parent=0 // pred_region
    _
  $region9: #{encoder_forward.5} parent=0 // pred_fallthru
    _
  // Predicated region
  $region10: #{encoder_forward.5} parent=0 // pred_check
    _
  $region11: #{encoder_forward.5} parent=0 // pred_check_branch
    %14 = sbr.rel (0) target = $region13
  $region12: #{encoder_forward.5} parent=0 // pred_region
    _
  $region13: #{encoder_forward.5} parent=0 // pred_fallthru
    _
  // Predicated region
  $region14: #{encoder_forward.5} parent=0 // pred_check
    _
  $region15: #{encoder_forward.5} parent=0 // pred_check_branch
    %16 = sbr.rel (0) target = $region17
  $region16: #{encoder_forward.5} parent=0 // pred_region
    _
  $region17: #{encoder_forward.5} parent=0 // pred_fallthru
    _
  %v18 = vld [vmem:[%s0] sm:$0xf]
  %v19 = vld [vmem:[%s0 + $0x4] sm:$0xf]
  %v20 = vld [vmem:[%s0 + $0x8] sm:$0xf]
  %v21 = vld [vmem:[%s0 + $0xc] sm:$0xf]
  %v22 = vld [vmem:[%s0 + $0x10] sm:$0xf]
  %v23 = vld [vmem:[%s0 + $0x14] sm:$0xf]
  %v24 = vld [vmem:[%s0 + $0x18] sm:$0xf]
  %v25 = vld [vmem:[%s0 + $0x1c] sm:$0xf]
  %v26 = vld [vmem:[%s0 + $0x20] sm:$0xf]
  %v27 = vld [vmem:[%s0 + $0x24] sm:$0xf]
  %v28 = vld [vmem:[%s0 + $0x28] sm:$0xf]
  %v29 = vld [vmem:[%s0 + $0x2c] sm:$0xf]
  %v30 = vld [vmem:[%s0 + $0x30] sm:$0xf]
  %v31 = vld [vmem:[%s0 + $0x34] sm:$0xf]
  %v32 = vld [vmem:[%s0 + $0x38] sm:$0xf]
  %v33 = vld [vmem:[%s0 + $0x3c] sm:$0xf]
  %v34 = vld [vmem:[%s1] sm:$0xf]
  %v35 = vld [vmem:[%s1 + $0x4] sm:$0xf]
  %v36 = vld [vmem:[%s1 + $0x8] sm:$0xf]
  %v37 = vld [vmem:[%s1 + $0xc] sm:$0xf]
  %v38 = vld [vmem:[%s1 + $0x10] sm:$0xf]
  %v39 = vld [vmem:[%s1 + $0x14] sm:$0xf]
  %v40 = vld [vmem:[%s1 + $0x18] sm:$0xf]
  %v41 = vld [vmem:[%s1 + $0x1c] sm:$0xf]
  %v42 = vld [vmem:[%s1 + $0x20] sm:$0xf]
  %v43 = vld [vmem:[%s1 + $0x24] sm:$0xf]
  %v44 = vld [vmem:[%s1 + $0x28] sm:$0xf]
  %v45 = vld [vmem:[%s1 + $0x2c] sm:$0xf]
  %v46 = vld [vmem:[%s1 + $0x30] sm:$0xf]
  %v47 = vld [vmem:[%s1 + $0x34] sm:$0xf]
  %v48 = vld [vmem:[%s1 + $0x38] sm:$0xf]
  %v49 = vld [vmem:[%s1 + $0x3c] sm:$0xf]
  %v66 = vunpack.c.l.b16 %v18
  %v67 = vunpack.c.l.b16 %v19
  %v68 = vunpack.c.l.b16 %v20
  %v69 = vunpack.c.l.b16 %v21
  %v70 = vunpack.c.l.b16 %v22
  %v71 = vunpack.c.l.b16 %v23
  %v72 = vunpack.c.l.b16 %v24
  %v73 = vunpack.c.l.b16 %v25
  %v74 = vunpack.c.l.b16 %v26
  %v75 = vunpack.c.l.b16 %v27
  %v76 = vunpack.c.l.b16 %v28
  %v77 = vunpack.c.l.b16 %v29
  %v78 = vunpack.c.l.b16 %v30
  %v79 = vunpack.c.l.b16 %v31
  %v80 = vunpack.c.l.b16 %v32
  %v81 = vunpack.c.l.b16 %v33
  %v82 = vpack.c.b16 %v67, %v66
  %v83 = vpack.c.b16 %v69, %v68
  %v84 = vpack.c.b16 %v71, %v70
  %v85 = vpack.c.b16 %v73, %v72
  %v86 = vpack.c.b16 %v75, %v74
  %v87 = vpack.c.b16 %v77, %v76
  %v88 = vpack.c.b16 %v79, %v78
  %v89 = vpack.c.b16 %v81, %v80
  %v114 = vunpack.c.l.b16 %v34
  %v115 = vunpack.c.l.b16 %v35
  %v116 = vunpack.c.l.b16 %v36
  %v117 = vunpack.c.l.b16 %v37
  %v118 = vunpack.c.l.b16 %v38
  %v119 = vunpack.c.l.b16 %v39
  %v120 = vunpack.c.l.b16 %v40
  %v121 = vunpack.c.l.b16 %v41
  %v122 = vunpack.c.l.b16 %v42
  %v123 = vunpack.c.l.b16 %v43
  %v124 = vunpack.c.l.b16 %v44
  %v125 = vunpack.c.l.b16 %v45
  %v126 = vunpack.c.l.b16 %v46
  %v127 = vunpack.c.l.b16 %v47
  %v128 = vunpack.c.l.b16 %v48
  %v129 = vunpack.c.l.b16 %v49
  %v130 = vpack.c.b16 %v115, %v114
  %v131 = vpack.c.b16 %v117, %v116
  %v132 = vpack.c.b16 %v119, %v118
  %v133 = vpack.c.b16 %v121, %v120
  %v134 = vpack.c.b16 %v123, %v122
  %v135 = vpack.c.b16 %v125, %v124
  %v136 = vpack.c.b16 %v127, %v126
  %v137 = vpack.c.b16 %v129, %v128
  %146 = vmatprep.subr.bf16.mxu0 0
  %147 = vmatpush1.bf16.msra.mxu0 %v130
  %148 = vmatprep.subr.bf16.mxu0 0
  %149 = vmatpush1.bf16.msra.mxu0 %v131
  %150 = vmatprep.subr.bf16.mxu0 0
  %151 = vmatpush1.bf16.msra.mxu0 %v132
  %152 = vmatprep.subr.bf16.mxu0 0
  %153 = vmatpush1.bf16.msra.mxu0 %v133
  %154 = vmatprep.subr.bf16.mxu0 0
  %155 = vmatpush1.bf16.msra.mxu0 %v134
  %156 = vmatprep.subr.bf16.mxu0 0
  %157 = vmatpush1.bf16.msra.mxu0 %v135
  %158 = vmatprep.subr.bf16.mxu0 0
  %159 = vmatpush1.bf16.msra.mxu0 %v136
  %160 = vmatprep.subr.bf16.mxu0 0
  %161 = vmatpush1.bf16.msra.mxu0 %v137
  %162 = vmatprep.subr.bf16.mxu0 0
  %163 = vmatpush1.bf16.msra.mxu0 0
  %164 = vmatprep.subr.bf16.mxu0 0
  %165 = vmatpush1.bf16.msra.mxu0 0
  %166 = vmatprep.subr.bf16.mxu0 0
  %167 = vmatpush1.bf16.msra.mxu0 0
  %168 = vmatprep.subr.bf16.mxu0 0
  %169 = vmatpush1.bf16.msra.mxu0 0
  %170 = vmatprep.subr.bf16.mxu0 0
  %171 = vmatpush1.bf16.msra.mxu0 0
  %172 = vmatprep.subr.bf16.mxu0 0
  %173 = vmatpush1.bf16.msra.mxu0 0
  %174 = vmatprep.subr.bf16.mxu0 0
  %175 = vmatpush1.bf16.msra.mxu0 0
  %176 = vmatprep.subr.bf16.mxu0 0
  %177 = vmatpush1.bf16.msra.mxu0 0
  %178 = vmatprep.mubr.bf16.mxu0 0
  %179 = vmatmul.mubr.bf16.gmra.mrb[0].mxu0 %v82
  %v180 = vpop.f32.mrb[0].mxu0
  %v181 = vadd.f32 0.0, %v180
  %v182 = vpop.f32.mrb[0].mxu0
  %v183 = vpop.f32.mrb[0].mxu0
  %v184 = vadd.f32 0.0, %v183
  %v185 = vpop.f32.mrb[0].mxu0
  %186 = vmatprep.mubr.bf16.mxu0 0
  %187 = vmatmul.mubr.bf16.gmra.mrb[0].mxu0 %v83
  %v188 = vpop.f32.mrb[0].mxu0
  %v189 = vadd.f32 0.0, %v188
  %v190 = vpop.f32.mrb[0].mxu0
  %v191 = vpop.f32.mrb[0].mxu0
  %v192 = vadd.f32 0.0, %v191
  %v193 = vpop.f32.mrb[0].mxu0
  %194 = vmatprep.mubr.bf16.mxu0 0
  %195 = vmatmul.mubr.bf16.gmra.mrb[0].mxu0 %v84
  %v196 = vpop.f32.mrb[0].mxu0
  %v197 = vadd.f32 0.0, %v196
  %v198 = vpop.f32.mrb[0].mxu0
  %v199 = vpop.f32.mrb[0].mxu0
  %v200 = vadd.f32 0.0, %v199
  %v201 = vpop.f32.mrb[0].mxu0
  %202 = vmatprep.mubr.bf16.mxu0 0
  %203 = vmatmul.mubr.bf16.gmra.mrb[0].mxu0 %v85
  %v204 = vpop.f32.mrb[0].mxu0
  %v205 = vadd.f32 0.0, %v204
  %v206 = vpop.f32.mrb[0].mxu0
  %v207 = vpop.f32.mrb[0].mxu0
  %v208 = vadd.f32 0.0, %v207
  %v209 = vpop.f32.mrb[0].mxu0
  %210 = vmatprep.mubr.bf16.mxu0 0
  %211 = vmatmul.mubr.bf16.gmra.mrb[0].mxu0 %v86
  %v212 = vpop.f32.mrb[0].mxu0
  %v213 = vadd.f32 0.0, %v212
  %v214 = vpop.f32.mrb[0].mxu0
  %v215 = vpop.f32.mrb[0].mxu0
  %v216 = vadd.f32 0.0, %v215
  %v217 = vpop.f32.mrb[0].mxu0
  %218 = vmatprep.mubr.bf16.mxu0 0
  %219 = vmatmul.mubr.bf16.gmra.mrb[0].mxu0 %v87
  %v220 = vpop.f32.mrb[0].mxu0
  %v221 = vadd.f32 0.0, %v220
  %v222 = vpop.f32.mrb[0].mxu0
  %v223 = vpop.f32.mrb[0].mxu0
  %v224 = vadd.f32 0.0, %v223
  %v225 = vpop.f32.mrb[0].mxu0
  %226 = vmatprep.mubr.bf16.mxu0 0
  %227 = vmatmul.mubr.bf16.gmra.mrb[0].mxu0 %v88
  %v228 = vpop.f32.mrb[0].mxu0
  %v229 = vadd.f32 0.0, %v228
  %v230 = vpop.f32.mrb[0].mxu0
  %v231 = vpop.f32.mrb[0].mxu0
  %v232 = vadd.f32 0.0, %v231
  %v233 = vpop.f32.mrb[0].mxu0
  %234 = vmatprep.mubr.bf16.mxu0 0
  %235 = vmatmul.mubr.bf16.gmra.mrb[0].mxu0 %v89
  %v236 = vpop.f32.mrb[0].mxu0
  %v237 = vadd.f32 0.0, %v236
  %v238 = vpop.f32.mrb[0].mxu0
  %v239 = vpop.f32.mrb[0].mxu0
  %v240 = vadd.f32 0.0, %v239
  %v241 = vpop.f32.mrb[0].mxu0
  %242 = vdwg.mxu0
  %v243 = vld [vmem:[%s2] sm:$0x1]
  %v245 = vlaneseq
  %v246 = vshrl.u32 %v245, 7
  %v247 = vsub.s32 0, %v246
  %v248 = vrot.slane %v243, %v247
  %v250 = vmul.f32 %v181, %v248
  %v251 = vmul.f32 %v184, %v248
  %v252 = vmul.f32 %v189, %v248
  %v253 = vmul.f32 %v192, %v248
  %v254 = vmul.f32 %v197, %v248
  %v255 = vmul.f32 %v200, %v248
  %v256 = vmul.f32 %v205, %v248
  %v257 = vmul.f32 %v208, %v248
  %v258 = vmul.f32 %v213, %v248
  %v259 = vmul.f32 %v216, %v248
  %v260 = vmul.f32 %v221, %v248
  %v261 = vmul.f32 %v224, %v248
  %v262 = vmul.f32 %v229, %v248
  %v263 = vmul.f32 %v232, %v248
  %v264 = vmul.f32 %v237, %v248
  %v265 = vmul.f32 %v240, %v248
  %v266 = vld [vmem:[%s3] sm:$0x1]
  %v268 = vlaneseq
  %v269 = vshrl.u32 %v268, 7
  %v270 = vsub.s32 0, %v269
  %v271 = vrot.slane %v266, %v270
  %v273 = vadd.f32 %v250, %v271
  %v274 = vadd.f32 %v251, %v271
  %v275 = vadd.f32 %v252, %v271
  %v276 = vadd.f32 %v253, %v271
  %v277 = vadd.f32 %v254, %v271
  %v278 = vadd.f32 %v255, %v271
  %v279 = vadd.f32 %v256, %v271
  %v280 = vadd.f32 %v257, %v271
  %v281 = vadd.f32 %v258, %v271
  %v282 = vadd.f32 %v259, %v271
  %v283 = vadd.f32 %v260, %v271
  %v284 = vadd.f32 %v261, %v271
  %v285 = vadd.f32 %v262, %v271
  %v286 = vadd.f32 %v263, %v271
  %v287 = vadd.f32 %v264, %v271
  %v288 = vadd.f32 %v265, %v271
  %v289 = vmax.f32 %v273, 0.0
  %v290 = vmax.f32 %v274, 0.0
  %v291 = vmax.f32 %v275, 0.0
  %v292 = vmax.f32 %v276, 0.0
  %v293 = vmax.f32 %v277, 0.0
  %v294 = vmax.f32 %v278, 0.0
  %v295 = vmax.f32 %v279, 0.0
  %v296 = vmax.f32 %v280, 0.0
  %v297 = vmax.f32 %v281, 0.0
  %v298 = vmax.f32 %v282, 0.0
  %v299 = vmax.f32 %v283, 0.0
  %v300 = vmax.f32 %v284, 0.0
  %v301 = vmax.f32 %v285, 0.0
  %v302 = vmax.f32 %v286, 0.0
  %v303 = vmax.f32 %v287, 0.0
  %v304 = vmax.f32 %v288, 0.0
  %305 = vst [vmem:[%s4] sm:$0xff] %v289
  %306 = vst [vmem:[%s4 + $0x8] sm:$0xff] %v290
  %307 = vst [vmem:[%s4 + $0x10] sm:$0xff] %v291
  %308 = vst [vmem:[%s4 + $0x18] sm:$0xff] %v292
  %309 = vst [vmem:[%s4 + $0x20] sm:$0xff] %v293
  %310 = vst [vmem:[%s4 + $0x28] sm:$0xff] %v294
  %311 = vst [vmem:[%s4 + $0x30] sm:$0xff] %v295
  %312 = vst [vmem:[%s4 + $0x38] sm:$0xff] %v296
  %313 = vst [vmem:[%s4 + $0x40] sm:$0xff] %v297
  %314 = vst [vmem:[%s4 + $0x48] sm:$0xff] %v298
  %315 = vst [vmem:[%s4 + $0x50] sm:$0xff] %v299
  %316 = vst [vmem:[%s4 + $0x58] sm:$0xff] %v300
  %317 = vst [vmem:[%s4 + $0x60] sm:$0xff] %v301
  %318 = vst [vmem:[%s4 + $0x68] sm:$0xff] %v302
  %319 = vst [vmem:[%s4 + $0x70] sm:$0xff] %v303
  %320 = vst [vmem:[%s4 + $0x78] sm:$0xff] %v304
  // Predicated region
  $region18: #{encoder_forward.5} parent=0 // pred_check
    _
  $region19: #{encoder_forward.5} parent=0 // pred_check_branch
    %322 = sbr.rel (0) target = $region21
  $region20: #{encoder_forward.5} parent=0 // pred_region
    _
  $region21: #{encoder_forward.5} parent=0 // pred_fallthru
    _
  // Predicated region
  $region22: #{encoder_forward.5} parent=0 // pred_check
    _
  $region23: #{encoder_forward.5} parent=0 // pred_check_branch
    %324 = sbr.rel (0) target = $region25
  $region24: #{encoder_forward.5} parent=0 // pred_region
    _
  $region25: #{encoder_forward.5} parent=0 // pred_fallthru
    _

// kernel: encoder_forward.6
$region0: #{encoder_forward.6}
  #allocation0 [shape = 'u32[]', space=smem, size = 0x4, offset = 0x4, fixed_abs, tag = 'smem constant byte address 0x4 - core index']
  #allocation1 [shape = 'u32[144,128]{1,0:T(1,128)}', space=vmem, size = 0x12000, scoped, tag = 'internal scratch']
  %s0 = inlined_call_operand.vmem [shape: bf16[128,256], index: 0, kind: input, shape index: {}]
  %s1 = inlined_call_operand.vmem [shape: bf16[256,128], index: 1, kind: input, shape index: {}]
  %s2 = inlined_call_operand.vmem [shape: f32[1,128], index: 2, kind: output, shape index: {0}]
  %s3 = inlined_call_operand.vmem [shape: f32[1,128], index: 3, kind: output, shape index: {1}]
  %4 = xla_tuple %s2, %s3
  %s5 = sld [smem:[#allocation0]]
  $region30: #{encoder_forward.6} parent=0
    _
  %s7 = ssub.s32 1, %s5
  %s8 = scalar_select 0, %s7, %s5
  // Predicated region
  $region2: #{encoder_forward.6} parent=0 // pred_check
    _
  $region3: #{encoder_forward.6} parent=0 // pred_check_branch
    %10 = sbr.rel (0) target = $region5
  $region4: #{encoder_forward.6} parent=0 // pred_region
    _
  $region5: #{encoder_forward.6} parent=0 // pred_fallthru
    _
  // Predicated region
  $region6: #{encoder_forward.6} parent=0 // pred_check
    _
  $region7: #{encoder_forward.6} parent=0 // pred_check_branch
    %12 = sbr.rel (0) target = $region9
  $region8: #{encoder_forward.6} parent=0 // pred_region
    _
  $region9: #{encoder_forward.6} parent=0 // pred_fallthru
    _
  %v14 = vld [vmem:[%s0] sm:$0xff]
  %v15 = vld [vmem:[%s0 + $0x8] sm:$0xff]
  %v16 = vld [vmem:[%s0 + $0x10] sm:$0xff]
  %v17 = vld [vmem:[%s0 + $0x18] sm:$0xff]
  %v18 = vld [vmem:[%s0 + $0x20] sm:$0xff]
  %v19 = vld [vmem:[%s0 + $0x28] sm:$0xff]
  %v20 = vld [vmem:[%s0 + $0x30] sm:$0xff]
  %v21 = vld [vmem:[%s0 + $0x38] sm:$0xff]
  %v22 = vld [vmem:[%s0 + $0x40] sm:$0xff]
  %v23 = vld [vmem:[%s0 + $0x48] sm:$0xff]
  %v24 = vld [vmem:[%s0 + $0x50] sm:$0xff]
  %v25 = vld [vmem:[%s0 + $0x58] sm:$0xff]
  %v26 = vld [vmem:[%s0 + $0x60] sm:$0xff]
  %v27 = vld [vmem:[%s0 + $0x68] sm:$0xff]
  %v28 = vld [vmem:[%s0 + $0x70] sm:$0xff]
  %v29 = vld [vmem:[%s0 + $0x78] sm:$0xff]
  %v30 = vld [vmem:[%s1] sm:$0xf]
  %v31 = vld [vmem:[%s1 + $0x4] sm:$0xf]
  %v32 = vld [vmem:[%s1 + $0x8] sm:$0xf]
  %v33 = vld [vmem:[%s1 + $0xc] sm:$0xf]
  %v34 = vld [vmem:[%s1 + $0x10] sm:$0xf]
  %v35 = vld [vmem:[%s1 + $0x14] sm:$0xf]
  %v36 = vld [vmem:[%s1 + $0x18] sm:$0xf]
  %v37 = vld [vmem:[%s1 + $0x1c] sm:$0xf]
  %v38 = vld [vmem:[%s1 + $0x20] sm:$0xf]
  %v39 = vld [vmem:[%s1 + $0x24] sm:$0xf]
  %v40 = vld [vmem:[%s1 + $0x28] sm:$0xf]
  %v41 = vld [vmem:[%s1 + $0x2c] sm:$0xf]
  %v42 = vld [vmem:[%s1 + $0x30] sm:$0xf]
  %v43 = vld [vmem:[%s1 + $0x34] sm:$0xf]
  %v44 = vld [vmem:[%s1 + $0x38] sm:$0xf]
  %v45 = vld [vmem:[%s1 + $0x3c] sm:$0xf]
  %v46 = vld [vmem:[%s1 + $0x40] sm:$0xf]
  %v47 = vld [vmem:[%s1 + $0x44] sm:$0xf]
  %v48 = vld [vmem:[%s1 + $0x48] sm:$0xf]
  %v49 = vld [vmem:[%s1 + $0x4c] sm:$0xf]
  %v50 = vld [vmem:[%s1 + $0x50] sm:$0xf]
  %v51 = vld [vmem:[%s1 + $0x54] sm:$0xf]
  %v52 = vld [vmem:[%s1 + $0x58] sm:$0xf]
  %v53 = vld [vmem:[%s1 + $0x5c] sm:$0xf]
  %v54 = vld [vmem:[%s1 + $0x60] sm:$0xf]
  %v55 = vld [vmem:[%s1 + $0x64] sm:$0xf]
  %v56 = vld [vmem:[%s1 + $0x68] sm:$0xf]
  %v57 = vld [vmem:[%s1 + $0x6c] sm:$0xf]
  %v58 = vld [vmem:[%s1 + $0x70] sm:$0xf]
  %v59 = vld [vmem:[%s1 + $0x74] sm:$0xf]
  %v60 = vld [vmem:[%s1 + $0x78] sm:$0xf]
  %v61 = vld [vmem:[%s1 + $0x7c] sm:$0xf]
  %v78 = vunpack.c.l.b16 %v14
  %v79 = vunpack.c.h.b16 %v14
  %v80 = vunpack.c.l.b16 %v15
  %v81 = vunpack.c.h.b16 %v15
  %v82 = vunpack.c.l.b16 %v16
  %v83 = vunpack.c.h.b16 %v16
  %v84 = vunpack.c.l.b16 %v17
  %v85 = vunpack.c.h.b16 %v17
  %v86 = vunpack.c.l.b16 %v18
  %v87 = vunpack.c.h.b16 %v18
  %v88 = vunpack.c.l.b16 %v19
  %v89 = vunpack.c.h.b16 %v19
  %v90 = vunpack.c.l.b16 %v20
  %v91 = vunpack.c.h.b16 %v20
  %v92 = vunpack.c.l.b16 %v21
  %v93 = vunpack.c.h.b16 %v21
  %v94 = vunpack.c.l.b16 %v22
  %v95 = vunpack.c.h.b16 %v22
  %v96 = vunpack.c.l.b16 %v23
  %v97 = vunpack.c.h.b16 %v23
  %v98 = vunpack.c.l.b16 %v24
  %v99 = vunpack.c.h.b16 %v24
  %v100 = vunpack.c.l.b16 %v25
  %v101 = vunpack.c.h.b16 %v25
  %v102 = vunpack.c.l.b16 %v26
  %v103 = vunpack.c.h.b16 %v26
  %v104 = vunpack.c.l.b16 %v27
  %v105 = vunpack.c.h.b16 %v27
  %v106 = vunpack.c.l.b16 %v28
  %v107 = vunpack.c.h.b16 %v28
  %v108 = vunpack.c.l.b16 %v29
  %v109 = vunpack.c.h.b16 %v29
  %v110 = vpack.c.b16 %v80, %v78
  %v111 = vpack.c.b16 %v81, %v79
  %v112 = vpack.c.b16 %v84, %v82
  %v113 = vpack.c.b16 %v85, %v83
  %v114 = vpack.c.b16 %v88, %v86
  %v115 = vpack.c.b16 %v89, %v87
  %v116 = vpack.c.b16 %v92, %v90
  %v117 = vpack.c.b16 %v93, %v91
  %v118 = vpack.c.b16 %v96, %v94
  %v119 = vpack.c.b16 %v97, %v95
  %v120 = vpack.c.b16 %v100, %v98
  %v121 = vpack.c.b16 %v101, %v99
  %v122 = vpack.c.b16 %v104, %v102
  %v123 = vpack.c.b16 %v105, %v103
  %v124 = vpack.c.b16 %v108, %v106
  %v125 = vpack.c.b16 %v109, %v107
  %v174 = vunpack.c.l.b16 %v30
  %v175 = vunpack.c.l.b16 %v31
  %v176 = vunpack.c.l.b16 %v32
  %v177 = vunpack.c.l.b16 %v33
  %v178 = vunpack.c.l.b16 %v34
  %v179 = vunpack.c.l.b16 %v35
  %v180 = vunpack.c.l.b16 %v36
  %v181 = vunpack.c.l.b16 %v37
  %v182 = vunpack.c.l.b16 %v38
  %v183 = vunpack.c.l.b16 %v39
  %v184 = vunpack.c.l.b16 %v40
  %v185 = vunpack.c.l.b16 %v41
  %v186 = vunpack.c.l.b16 %v42
  %v187 = vunpack.c.l.b16 %v43
  %v188 = vunpack.c.l.b16 %v44
  %v189 = vunpack.c.l.b16 %v45
  %v190 = vunpack.c.l.b16 %v46
  %v191 = vunpack.c.l.b16 %v47
  %v192 = vunpack.c.l.b16 %v48
  %v193 = vunpack.c.l.b16 %v49
  %v194 = vunpack.c.l.b16 %v50
  %v195 = vunpack.c.l.b16 %v51
  %v196 = vunpack.c.l.b16 %v52
  %v197 = vunpack.c.l.b16 %v53
  %v198 = vunpack.c.l.b16 %v54
  %v199 = vunpack.c.l.b16 %v55
  %v200 = vunpack.c.l.b16 %v56
  %v201 = vunpack.c.l.b16 %v57
  %v202 = vunpack.c.l.b16 %v58
  %v203 = vunpack.c.l.b16 %v59
  %v204 = vunpack.c.l.b16 %v60
  %v205 = vunpack.c.l.b16 %v61
  %v206 = vpack.c.b16 %v175, %v174
  %v207 = vpack.c.b16 %v177, %v176
  %v208 = vpack.c.b16 %v179, %v178
  %v209 = vpack.c.b16 %v181, %v180
  %v210 = vpack.c.b16 %v183, %v182
  %v211 = vpack.c.b16 %v185, %v184
  %v212 = vpack.c.b16 %v187, %v186
  %v213 = vpack.c.b16 %v189, %v188
  %v214 = vpack.c.b16 %v191, %v190
  %v215 = vpack.c.b16 %v193, %v192
  %v216 = vpack.c.b16 %v195, %v194
  %v217 = vpack.c.b16 %v197, %v196
  %v218 = vpack.c.b16 %v199, %v198
  %v219 = vpack.c.b16 %v201, %v200
  %v220 = vpack.c.b16 %v203, %v202
  %v221 = vpack.c.b16 %v205, %v204
  %238 = vmatprep.subr.bf16.mxu0 0
  %239 = vmatpush1.bf16.msra.mxu0 %v206
  %240 = vmatprep.subr.bf16.mxu0 0
  %241 = vmatpush1.bf16.msra.mxu0 %v207
  %242 = vmatprep.subr.bf16.mxu0 0
  %243 = vmatpush1.bf16.msra.mxu0 %v208
  %244 = vmatprep.subr.bf16.mxu0 0
  %245 = vmatpush1.bf16.msra.mxu0 %v209
  %246 = vmatprep.subr.bf16.mxu0 0
  %247 = vmatpush1.bf16.msra.mxu0 %v210
  %248 = vmatprep.subr.bf16.mxu0 0
  %249 = vmatpush1.bf16.msra.mxu0 %v211
  %250 = vmatprep.subr.bf16.mxu0 0
  %251 = vmatpush1.bf16.msra.mxu0 %v212
  %252 = vmatprep.subr.bf16.mxu0 0
  %253 = vmatpush1.bf16.msra.mxu0 %v213
  %254 = vmatprep.subr.bf16.mxu0 0
  %255 = vmatpush1.bf16.msra.mxu0 %v214
  %256 = vmatprep.subr.bf16.mxu0 0
  %257 = vmatpush1.bf16.msra.mxu0 %v215
  %258 = vmatprep.subr.bf16.mxu0 0
  %259 = vmatpush1.bf16.msra.mxu0 %v216
  %260 = vmatprep.subr.bf16.mxu0 0
  %261 = vmatpush1.bf16.msra.mxu0 %v217
  %262 = vmatprep.subr.bf16.mxu0 0
  %263 = vmatpush1.bf16.msra.mxu0 %v218
  %264 = vmatprep.subr.bf16.mxu0 0
  %265 = vmatpush1.bf16.msra.mxu0 %v219
  %266 = vmatprep.subr.bf16.mxu0 0
  %267 = vmatpush1.bf16.msra.mxu0 %v220
  %268 = vmatprep.subr.bf16.mxu0 0
  %269 = vmatpush1.bf16.msra.mxu0 %v221
  %270 = vmatprep.mubr.bf16.mxu0 %v111
  %271 = vmatmul.mubr.bf16.gmra.mrb[0].mxu0 %v110
  %v272 = vpop.f32.mrb[0].mxu0
  %v273 = vadd.f32 0.0, %v272
  %v274 = vpop.f32.mrb[0].mxu0
  %v275 = vpop.f32.mrb[0].mxu0
  %v276 = vadd.f32 0.0, %v275
  %v277 = vpop.f32.mrb[0].mxu0
  %278 = vmatprep.mubr.bf16.mxu0 %v113
  %279 = vmatmul.mubr.bf16.gmra.mrb[0].mxu0 %v112
  %v280 = vpop.f32.mrb[0].mxu0
  %v281 = vadd.f32 0.0, %v280
  %v282 = vpop.f32.mrb[0].mxu0
  %v283 = vpop.f32.mrb[0].mxu0
  %v284 = vadd.f32 0.0, %v283
  %v285 = vpop.f32.mrb[0].mxu0
  %286 = vmatprep.mubr.bf16.mxu0 %v115
  %287 = vmatmul.mubr.bf16.gmra.mrb[0].mxu0 %v114
  %v288 = vpop.f32.mrb[0].mxu0
  %v289 = vadd.f32 0.0, %v288
  %v290 = vpop.f32.mrb[0].mxu0
  %v291 = vpop.f32.mrb[0].mxu0
  %v292 = vadd.f32 0.0, %v291
  %v293 = vpop.f32.mrb[0].mxu0
  %294 = vmatprep.mubr.bf16.mxu0 %v117
  %295 = vmatmul.mubr.bf16.gmra.mrb[0].mxu0 %v116
  %v296 = vpop.f32.mrb[0].mxu0
  %v297 = vadd.f32 0.0, %v296
  %v298 = vpop.f32.mrb[0].mxu0
  %v299 = vpop.f32.mrb[0].mxu0
  %v300 = vadd.f32 0.0, %v299
  %v301 = vpop.f32.mrb[0].mxu0
  %302 = vmatprep.mubr.bf16.mxu0 %v119
  %303 = vmatmul.mubr.bf16.gmra.mrb[0].mxu0 %v118
  %v304 = vpop.f32.mrb[0].mxu0
  %v305 = vadd.f32 0.0, %v304
  %v306 = vpop.f32.mrb[0].mxu0
  %v307 = vpop.f32.mrb[0].mxu0
  %v308 = vadd.f32 0.0, %v307
  %v309 = vpop.f32.mrb[0].mxu0
  %310 = vmatprep.mubr.bf16.mxu0 %v121
  %311 = vmatmul.mubr.bf16.gmra.mrb[0].mxu0 %v120
  %v312 = vpop.f32.mrb[0].mxu0
  %v313 = vadd.f32 0.0, %v312
  %v314 = vpop.f32.mrb[0].mxu0
  %v315 = vpop.f32.mrb[0].mxu0
  %v316 = vadd.f32 0.0, %v315
  %v317 = vpop.f32.mrb[0].mxu0
  %318 = vmatprep.mubr.bf16.mxu0 %v123
  %319 = vmatmul.mubr.bf16.gmra.mrb[0].mxu0 %v122
  %v320 = vpop.f32.mrb[0].mxu0
  %v321 = vadd.f32 0.0, %v320
  %v322 = vpop.f32.mrb[0].mxu0
  %v323 = vpop.f32.mrb[0].mxu0
  %v324 = vadd.f32 0.0, %v323
  %v325 = vpop.f32.mrb[0].mxu0
  %326 = vmatprep.mubr.bf16.mxu0 %v125
  %327 = vmatmul.mubr.bf16.gmra.mrb[0].mxu0 %v124
  %v328 = vpop.f32.mrb[0].mxu0
  %v329 = vadd.f32 0.0, %v328
  %v330 = vpop.f32.mrb[0].mxu0
  %v331 = vpop.f32.mrb[0].mxu0
  %v332 = vadd.f32 0.0, %v331
  %v333 = vpop.f32.mrb[0].mxu0
  %334 = vdwg.mxu0
  %p335 = scmp.eq.s32.totalorder 0, 0
  // Predicated region
  $region10: #{encoder_forward.6} parent=0 // pred_check
    %p336 = pneg %p335
  $region11: #{encoder_forward.6} parent=0 // pred_check_branch
    %338 = sbr.rel (%p336) target = $region13
  $region12: #{encoder_forward.6} parent=0 // pred_region
    %339 = vst [vmem:[%s2] sm:$0x1] 0.0
    %340 = vst [vmem:[%s3] sm:$0x1] 0.0
  $region13: #{encoder_forward.6} parent=0 // pred_fallthru
    _
  %v341 = vld [vmem:[%s2] sm:$0x1]
  %v342 = vadd.f32 %v273, %v276
  %v343 = vadd.f32 %v342, %v281
  %v344 = vadd.f32 %v343, %v284
  %v345 = vadd.f32 %v344, %v289
  %v346 = vadd.f32 %v345, %v292
  %v347 = vadd.f32 %v346, %v297
  %v348 = vadd.f32 %v347, %v300
  %v349 = vadd.f32 %v348, %v305
  %v350 = vadd.f32 %v349, %v308
  %v351 = vadd.f32 %v350, %v313
  %v352 = vadd.f32 %v351, %v316
  %v353 = vadd.f32 %v352, %v321
  %v354 = vadd.f32 %v353, %v324
  %v355 = vadd.f32 %v354, %v329
  %v356 = vadd.f32 %v355, %v332
  %v357 = vrot.slane %v356, 4
  %v358 = vadd.f32 %v356, %v357
  %v359 = vrot.slane %v358, 2
  %v360 = vadd.f32 %v358, %v359
  %v361 = vrot.slane %v360, 1
  %v362 = vadd.f32 %v360, %v361
  %v363 = vadd.f32 %v341, %v362
  %364 = vst [vmem:[%s2] sm:$0x1] %v363
  %v365 = vld [vmem:[%s3] sm:$0x1]
  %v366 = vmul.f32 %v273, %v273
  %v367 = vmul.f32 %v276, %v276
  %v368 = vmul.f32 %v281, %v281
  %v369 = vmul.f32 %v284, %v284
  %v370 = vmul.f32 %v289, %v289
  %v371 = vmul.f32 %v292, %v292
  %v372 = vmul.f32 %v297, %v297
  %v373 = vmul.f32 %v300, %v300
  %v374 = vmul.f32 %v305, %v305
  %v375 = vmul.f32 %v308, %v308
  %v376 = vmul.f32 %v313, %v313
  %v377 = vmul.f32 %v316, %v316
  %v378 = vmul.f32 %v321, %v321
  %v379 = vmul.f32 %v324, %v324
  %v380 = vmul.f32 %v329, %v329
  %v381 = vmul.f32 %v332, %v332
  %v382 = vadd.f32 %v366, %v367
  %v383 = vadd.f32 %v382, %v368
  %v384 = vadd.f32 %v383, %v369
  %v385 = vadd.f32 %v384, %v370
  %v386 = vadd.f32 %v385, %v371
  %v387 = vadd.f32 %v386, %v372
  %v388 = vadd.f32 %v387, %v373
  %v389 = vadd.f32 %v388, %v374
  %v390 = vadd.f32 %v389, %v375
  %v391 = vadd.f32 %v390, %v376
  %v392 = vadd.f32 %v391, %v377
  %v393 = vadd.f32 %v392, %v378
  %v394 = vadd.f32 %v393, %v379
  %v395 = vadd.f32 %v394, %v380
  %v396 = vadd.f32 %v395, %v381
  %v397 = vrot.slane %v396, 4
  %v398 = vadd.f32 %v396, %v397
  %v399 = vrot.slane %v398, 2
  %v400 = vadd.f32 %v398, %v399
  %v401 = vrot.slane %v400, 1
  %v402 = vadd.f32 %v400, %v401
  %v403 = vadd.f32 %v365, %v402
  %404 = vst [vmem:[%s3] sm:$0x1] %v403
  // Predicated region
  $region14: #{encoder_forward.6} parent=0 // pred_check
    _
  $region15: #{encoder_forward.6} parent=0 // pred_check_branch
    %406 = sbr.rel (0) target = $region17
  $region16: #{encoder_forward.6} parent=0 // pred_region
    _
  $region17: #{encoder_forward.6} parent=0 // pred_fallthru
    _
  // Predicated region
  $region18: #{encoder_forward.6} parent=0 // pred_check
    _
  $region19: #{encoder_forward.6} parent=0 // pred_check_branch
    %408 = sbr.rel (0) target = $region21
  $region20: #{encoder_forward.6} parent=0 // pred_region
    _
  $region21: #{encoder_forward.6} parent=0 // pred_fallthru
    _
  // Predicated region
  $region22: #{encoder_forward.6} parent=0 // pred_check
    _
  $region23: #{encoder_forward.6} parent=0 // pred_check_branch
    %410 = sbr.rel (0) target = $region25
  $region24: #{encoder_forward.6} parent=0 // pred_region
    _
  $region25: #{encoder_forward.6} parent=0 // pred_fallthru
    _
  // Predicated region
  $region26: #{encoder_forward.6} parent=0 // pred_check
    _
  $region27: #{encoder_forward.6} parent=0 // pred_check_branch
    %412 = sbr.rel (0) target = $region29
  $region28: #{encoder_forward.6} parent=0 // pred_region
    _
  $region29: #{encoder_forward.6} parent=0 // pred_fallthru
    _

// kernel: encoder_forward.7
$region0: #{encoder_forward.7}
  #allocation0 [shape = 'u32[]', space=smem, size = 0x4, offset = 0x4, fixed_abs, tag = 'smem constant byte address 0x4 - core index']
  #allocation1 [shape = 'u32[144,128]{1,0:T(1,128)}', space=vmem, size = 0x12000, scoped, tag = 'internal scratch']
  %s0 = inlined_call_operand.vmem [shape: bf16[128,256], index: 0, kind: input, shape index: {}]
  %s1 = inlined_call_operand.vmem [shape: bf16[256,128], index: 1, kind: input, shape index: {}]
  %s2 = inlined_call_operand.vmem [shape: f32[1,128], index: 2, kind: input, shape index: {}]
  %s3 = inlined_call_operand.vmem [shape: f32[1,128], index: 3, kind: input, shape index: {}]
  %s4 = inlined_call_operand.hbm [shape: f32[128,128], index: 4, kind: output, shape index: {}]
  %s5 = sld [smem:[#allocation0]]
  $region26: #{encoder_forward.7} parent=0
    _
  %s7 = ssub.s32 1, %s5
  %s8 = scalar_select 0, %s7, %s5
  $region1: #{encoder_forward.7} parent=0
    #allocation2 [shape = 'u8[65536]{0}', space=vmem, size = 0x10000, scoped, tag = 'output window, operand 0, single buffered']
    #allocation3 [shape = 's32[1]{0}', space=sflag, size = 0x4, scoped, tag = 'scoped memory for encoder_forward.7']
    %9 = vsyncpa [#allocation3], 0
    // Predicated region
    $region2: #{encoder_forward.7} parent=1 // pred_check
      _
    $region3: #{encoder_forward.7} parent=1 // pred_check_branch
      %11 = sbr.rel (0) target = $region5
    $region4: #{encoder_forward.7} parent=1 // pred_region
      _
    $region5: #{encoder_forward.7} parent=1 // pred_fallthru
      _
    // Predicated region
    $region6: #{encoder_forward.7} parent=1 // pred_check
      _
    $region7: #{encoder_forward.7} parent=1 // pred_check_branch
      %13 = sbr.rel (0) target = $region9
    $region8: #{encoder_forward.7} parent=1 // pred_region
      _
    $region9: #{encoder_forward.7} parent=1 // pred_fallthru
      _
    // Predicated region
    $region10: #{encoder_forward.7} parent=1 // pred_check
      _
    $region11: #{encoder_forward.7} parent=1 // pred_check_branch
      %15 = sbr.rel (0) target = $region13
    $region12: #{encoder_forward.7} parent=1 // pred_region
      _
    $region13: #{encoder_forward.7} parent=1 // pred_fallthru
      _
    // Predicated region
    $region14: #{encoder_forward.7} parent=1 // pred_check
      _
    $region15: #{encoder_forward.7} parent=1 // pred_check_branch
      %17 = sbr.rel (0) target = $region17
    $region16: #{encoder_forward.7} parent=1 // pred_region
      _
    $region17: #{encoder_forward.7} parent=1 // pred_fallthru
      _
    %v19 = vld [vmem:[%s0] sm:$0xff]
    %v20 = vld [vmem:[%s0 + $0x8] sm:$0xff]
    %v21 = vld [vmem:[%s0 + $0x10] sm:$0xff]
    %v22 = vld [vmem:[%s0 + $0x18] sm:$0xff]
    %v23 = vld [vmem:[%s0 + $0x20] sm:$0xff]
    %v24 = vld [vmem:[%s0 + $0x28] sm:$0xff]
    %v25 = vld [vmem:[%s0 + $0x30] sm:$0xff]
    %v26 = vld [vmem:[%s0 + $0x38] sm:$0xff]
    %v27 = vld [vmem:[%s0 + $0x40] sm:$0xff]
    %v28 = vld [vmem:[%s0 + $0x48] sm:$0xff]
    %v29 = vld [vmem:[%s0 + $0x50] sm:$0xff]
    %v30 = vld [vmem:[%s0 + $0x58] sm:$0xff]
    %v31 = vld [vmem:[%s0 + $0x60] sm:$0xff]
    %v32 = vld [vmem:[%s0 + $0x68] sm:$0xff]
    %v33 = vld [vmem:[%s0 + $0x70] sm:$0xff]
    %v34 = vld [vmem:[%s0 + $0x78] sm:$0xff]
    %v35 = vld [vmem:[%s1] sm:$0xf]
    %v36 = vld [vmem:[%s1 + $0x4] sm:$0xf]
    %v37 = vld [vmem:[%s1 + $0x8] sm:$0xf]
    %v38 = vld [vmem:[%s1 + $0xc] sm:$0xf]
    %v39 = vld [vmem:[%s1 + $0x10] sm:$0xf]
    %v40 = vld [vmem:[%s1 + $0x14] sm:$0xf]
    %v41 = vld [vmem:[%s1 + $0x18] sm:$0xf]
    %v42 = vld [vmem:[%s1 + $0x1c] sm:$0xf]
    %v43 = vld [vmem:[%s1 + $0x20] sm:$0xf]
    %v44 = vld [vmem:[%s1 + $0x24] sm:$0xf]
    %v45 = vld [vmem:[%s1 + $0x28] sm:$0xf]
    %v46 = vld [vmem:[%s1 + $0x2c] sm:$0xf]
    %v47 = vld [vmem:[%s1 + $0x30] sm:$0xf]
    %v48 = vld [vmem:[%s1 + $0x34] sm:$0xf]
    %v49 = vld [vmem:[%s1 + $0x38] sm:$0xf]
    %v50 = vld [vmem:[%s1 + $0x3c] sm:$0xf]
    %v51 = vld [vmem:[%s1 + $0x40] sm:$0xf]
    %v52 = vld [vmem:[%s1 + $0x44] sm:$0xf]
    %v53 = vld [vmem:[%s1 + $0x48] sm:$0xf]
    %v54 = vld [vmem:[%s1 + $0x4c] sm:$0xf]
    %v55 = vld [vmem:[%s1 + $0x50] sm:$0xf]
    %v56 = vld [vmem:[%s1 + $0x54] sm:$0xf]
    %v57 = vld [vmem:[%s1 + $0x58] sm:$0xf]
    %v58 = vld [vmem:[%s1 + $0x5c] sm:$0xf]
    %v59 = vld [vmem:[%s1 + $0x60] sm:$0xf]
    %v60 = vld [vmem:[%s1 + $0x64] sm:$0xf]
    %v61 = vld [vmem:[%s1 + $0x68] sm:$0xf]
    %v62 = vld [vmem:[%s1 + $0x6c] sm:$0xf]
    %v63 = vld [vmem:[%s1 + $0x70] sm:$0xf]
    %v64 = vld [vmem:[%s1 + $0x74] sm:$0xf]
    %v65 = vld [vmem:[%s1 + $0x78] sm:$0xf]
    %v66 = vld [vmem:[%s1 + $0x7c] sm:$0xf]
    %v83 = vunpack.c.l.b16 %v19
    %v84 = vunpack.c.h.b16 %v19
    %v85 = vunpack.c.l.b16 %v20
    %v86 = vunpack.c.h.b16 %v20
    %v87 = vunpack.c.l.b16 %v21
    %v88 = vunpack.c.h.b16 %v21
    %v89 = vunpack.c.l.b16 %v22
    %v90 = vunpack.c.h.b16 %v22
    %v91 = vunpack.c.l.b16 %v23
    %v92 = vunpack.c.h.b16 %v23
    %v93 = vunpack.c.l.b16 %v24
    %v94 = vunpack.c.h.b16 %v24
    %v95 = vunpack.c.l.b16 %v25
    %v96 = vunpack.c.h.b16 %v25
    %v97 = vunpack.c.l.b16 %v26
    %v98 = vunpack.c.h.b16 %v26
    %v99 = vunpack.c.l.b16 %v27
    %v100 = vunpack.c.h.b16 %v27
    %v101 = vunpack.c.l.b16 %v28
    %v102 = vunpack.c.h.b16 %v28
    %v103 = vunpack.c.l.b16 %v29
    %v104 = vunpack.c.h.b16 %v29
    %v105 = vunpack.c.l.b16 %v30
    %v106 = vunpack.c.h.b16 %v30
    %v107 = vunpack.c.l.b16 %v31
    %v108 = vunpack.c.h.b16 %v31
    %v109 = vunpack.c.l.b16 %v32
    %v110 = vunpack.c.h.b16 %v32
    %v111 = vunpack.c.l.b16 %v33
    %v112 = vunpack.c.h.b16 %v33
    %v113 = vunpack.c.l.b16 %v34
    %v114 = vunpack.c.h.b16 %v34
    %v115 = vpack.c.b16 %v85, %v83
    %v116 = vpack.c.b16 %v86, %v84
    %v117 = vpack.c.b16 %v89, %v87
    %v118 = vpack.c.b16 %v90, %v88
    %v119 = vpack.c.b16 %v93, %v91
    %v120 = vpack.c.b16 %v94, %v92
    %v121 = vpack.c.b16 %v97, %v95
    %v122 = vpack.c.b16 %v98, %v96
    %v123 = vpack.c.b16 %v101, %v99
    %v124 = vpack.c.b16 %v102, %v100
    %v125 = vpack.c.b16 %v105, %v103
    %v126 = vpack.c.b16 %v106, %v104
    %v127 = vpack.c.b16 %v109, %v107
    %v128 = vpack.c.b16 %v110, %v108
    %v129 = vpack.c.b16 %v113, %v111
    %v130 = vpack.c.b16 %v114, %v112
    %v179 = vunpack.c.l.b16 %v35
    %v180 = vunpack.c.l.b16 %v36
    %v181 = vunpack.c.l.b16 %v37
    %v182 = vunpack.c.l.b16 %v38
    %v183 = vunpack.c.l.b16 %v39
    %v184 = vunpack.c.l.b16 %v40
    %v185 = vunpack.c.l.b16 %v41
    %v186 = vunpack.c.l.b16 %v42
    %v187 = vunpack.c.l.b16 %v43
    %v188 = vunpack.c.l.b16 %v44
    %v189 = vunpack.c.l.b16 %v45
    %v190 = vunpack.c.l.b16 %v46
    %v191 = vunpack.c.l.b16 %v47
    %v192 = vunpack.c.l.b16 %v48
    %v193 = vunpack.c.l.b16 %v49
    %v194 = vunpack.c.l.b16 %v50
    %v195 = vunpack.c.l.b16 %v51
    %v196 = vunpack.c.l.b16 %v52
    %v197 = vunpack.c.l.b16 %v53
    %v198 = vunpack.c.l.b16 %v54
    %v199 = vunpack.c.l.b16 %v55
    %v200 = vunpack.c.l.b16 %v56
    %v201 = vunpack.c.l.b16 %v57
    %v202 = vunpack.c.l.b16 %v58
    %v203 = vunpack.c.l.b16 %v59
    %v204 = vunpack.c.l.b16 %v60
    %v205 = vunpack.c.l.b16 %v61
    %v206 = vunpack.c.l.b16 %v62
    %v207 = vunpack.c.l.b16 %v63
    %v208 = vunpack.c.l.b16 %v64
    %v209 = vunpack.c.l.b16 %v65
    %v210 = vunpack.c.l.b16 %v66
    %v211 = vpack.c.b16 %v180, %v179
    %v212 = vpack.c.b16 %v182, %v181
    %v213 = vpack.c.b16 %v184, %v183
    %v214 = vpack.c.b16 %v186, %v185
    %v215 = vpack.c.b16 %v188, %v187
    %v216 = vpack.c.b16 %v190, %v189
    %v217 = vpack.c.b16 %v192, %v191
    %v218 = vpack.c.b16 %v194, %v193
    %v219 = vpack.c.b16 %v196, %v195
    %v220 = vpack.c.b16 %v198, %v197
    %v221 = vpack.c.b16 %v200, %v199
    %v222 = vpack.c.b16 %v202, %v201
    %v223 = vpack.c.b16 %v204, %v203
    %v224 = vpack.c.b16 %v206, %v205
    %v225 = vpack.c.b16 %v208, %v207
    %v226 = vpack.c.b16 %v210, %v209
    %243 = vmatprep.subr.bf16.mxu0 0
    %244 = vmatpush1.bf16.msra.mxu0 %v211
    %245 = vmatprep.subr.bf16.mxu0 0
    %246 = vmatpush1.bf16.msra.mxu0 %v212
    %247 = vmatprep.subr.bf16.mxu0 0
    %248 = vmatpush1.bf16.msra.mxu0 %v213
    %249 = vmatprep.subr.bf16.mxu0 0
    %250 = vmatpush1.bf16.msra.mxu0 %v214
    %251 = vmatprep.subr.bf16.mxu0 0
    %252 = vmatpush1.bf16.msra.mxu0 %v215
    %253 = vmatprep.subr.bf16.mxu0 0
    %254 = vmatpush1.bf16.msra.mxu0 %v216
    %255 = vmatprep.subr.bf16.mxu0 0
    %256 = vmatpush1.bf16.msra.mxu0 %v217
    %257 = vmatprep.subr.bf16.mxu0 0
    %258 = vmatpush1.bf16.msra.mxu0 %v218
    %259 = vmatprep.subr.bf16.mxu0 0
    %260 = vmatpush1.bf16.msra.mxu0 %v219
    %261 = vmatprep.subr.bf16.mxu0 0
    %262 = vmatpush1.bf16.msra.mxu0 %v220
    %263 = vmatprep.subr.bf16.mxu0 0
    %264 = vmatpush1.bf16.msra.mxu0 %v221
    %265 = vmatprep.subr.bf16.mxu0 0
    %266 = vmatpush1.bf16.msra.mxu0 %v222
    %267 = vmatprep.subr.bf16.mxu0 0
    %268 = vmatpush1.bf16.msra.mxu0 %v223
    %269 = vmatprep.subr.bf16.mxu0 0
    %270 = vmatpush1.bf16.msra.mxu0 %v224
    %271 = vmatprep.subr.bf16.mxu0 0
    %272 = vmatpush1.bf16.msra.mxu0 %v225
    %273 = vmatprep.subr.bf16.mxu0 0
    %274 = vmatpush1.bf16.msra.mxu0 %v226
    %275 = vmatprep.mubr.bf16.mxu0 %v116
    %276 = vmatmul.mubr.bf16.gmra.mrb[0].mxu0 %v115
    %v277 = vpop.f32.mrb[0].mxu0
    %v278 = vadd.f32 0.0, %v277
    %v279 = vpop.f32.mrb[0].mxu0
    %v280 = vpop.f32.mrb[0].mxu0
    %v281 = vadd.f32 0.0, %v280
    %v282 = vpop.f32.mrb[0].mxu0
    %283 = vmatprep.mubr.bf16.mxu0 %v118
    %284 = vmatmul.mubr.bf16.gmra.mrb[0].mxu0 %v117
    %v285 = vpop.f32.mrb[0].mxu0
    %v286 = vadd.f32 0.0, %v285
    %v287 = vpop.f32.mrb[0].mxu0
    %v288 = vpop.f32.mrb[0].mxu0
    %v289 = vadd.f32 0.0, %v288
    %v290 = vpop.f32.mrb[0].mxu0
    %291 = vmatprep.mubr.bf16.mxu0 %v120
    %292 = vmatmul.mubr.bf16.gmra.mrb[0].mxu0 %v119
    %v293 = vpop.f32.mrb[0].mxu0
    %v294 = vadd.f32 0.0, %v293
    %v295 = vpop.f32.mrb[0].mxu0
    %v296 = vpop.f32.mrb[0].mxu0
    %v297 = vadd.f32 0.0, %v296
    %v298 = vpop.f32.mrb[0].mxu0
    %299 = vmatprep.mubr.bf16.mxu0 %v122
    %300 = vmatmul.mubr.bf16.gmra.mrb[0].mxu0 %v121
    %v301 = vpop.f32.mrb[0].mxu0
    %v302 = vadd.f32 0.0, %v301
    %v303 = vpop.f32.mrb[0].mxu0
    %v304 = vpop.f32.mrb[0].mxu0
    %v305 = vadd.f32 0.0, %v304
    %v306 = vpop.f32.mrb[0].mxu0
    %307 = vmatprep.mubr.bf16.mxu0 %v124
    %308 = vmatmul.mubr.bf16.gmra.mrb[0].mxu0 %v123
    %v309 = vpop.f32.mrb[0].mxu0
    %v310 = vadd.f32 0.0, %v309
    %v311 = vpop.f32.mrb[0].mxu0
    %v312 = vpop.f32.mrb[0].mxu0
    %v313 = vadd.f32 0.0, %v312
    %v314 = vpop.f32.mrb[0].mxu0
    %315 = vmatprep.mubr.bf16.mxu0 %v126
    %316 = vmatmul.mubr.bf16.gmra.mrb[0].mxu0 %v125
    %v317 = vpop.f32.mrb[0].mxu0
    %v318 = vadd.f32 0.0, %v317
    %v319 = vpop.f32.mrb[0].mxu0
    %v320 = vpop.f32.mrb[0].mxu0
    %v321 = vadd.f32 0.0, %v320
    %v322 = vpop.f32.mrb[0].mxu0
    %323 = vmatprep.mubr.bf16.mxu0 %v128
    %324 = vmatmul.mubr.bf16.gmra.mrb[0].mxu0 %v127
    %v325 = vpop.f32.mrb[0].mxu0
    %v326 = vadd.f32 0.0, %v325
    %v327 = vpop.f32.mrb[0].mxu0
    %v328 = vpop.f32.mrb[0].mxu0
    %v329 = vadd.f32 0.0, %v328
    %v330 = vpop.f32.mrb[0].mxu0
    %331 = vmatprep.mubr.bf16.mxu0 %v130
    %332 = vmatmul.mubr.bf16.gmra.mrb[0].mxu0 %v129
    %v333 = vpop.f32.mrb[0].mxu0
    %v334 = vadd.f32 0.0, %v333
    %v335 = vpop.f32.mrb[0].mxu0
    %v336 = vpop.f32.mrb[0].mxu0
    %v337 = vadd.f32 0.0, %v336
    %v338 = vpop.f32.mrb[0].mxu0
    %339 = vdwg.mxu0
    %v340 = vld [vmem:[%s2] sm:$0x1]
    %v342 = vlaneseq
    %v343 = vshrl.u32 %v342, 7
    %v344 = vsub.s32 0, %v343
    %v345 = vrot.slane %v340, %v344
    %v347 = vmul.f32 %v278, %v345
    %v348 = vmul.f32 %v281, %v345
    %v349 = vmul.f32 %v286, %v345
    %v350 = vmul.f32 %v289, %v345
    %v351 = vmul.f32 %v294, %v345
    %v352 = vmul.f32 %v297, %v345
    %v353 = vmul.f32 %v302, %v345
    %v354 = vmul.f32 %v305, %v345
    %v355 = vmul.f32 %v310, %v345
    %v356 = vmul.f32 %v313, %v345
    %v357 = vmul.f32 %v318, %v345
    %v358 = vmul.f32 %v321, %v345
    %v359 = vmul.f32 %v326, %v345
    %v360 = vmul.f32 %v329, %v345
    %v361 = vmul.f32 %v334, %v345
    %v362 = vmul.f32 %v337, %v345
    %v363 = vld [vmem:[%s3] sm:$0x1]
    %v365 = vlaneseq
    %v366 = vshrl.u32 %v365, 7
    %v367 = vsub.s32 0, %v366
    %v368 = vrot.slane %v363, %v367
    %v370 = vadd.f32 %v347, %v368
    %v371 = vadd.f32 %v348, %v368
    %v372 = vadd.f32 %v349, %v368
    %v373 = vadd.f32 %v350, %v368
    %v374 = vadd.f32 %v351, %v368
    %v375 = vadd.f32 %v352, %v368
    %v376 = vadd.f32 %v353, %v368
    %v377 = vadd.f32 %v354, %v368
    %v378 = vadd.f32 %v355, %v368
    %v379 = vadd.f32 %v356, %v368
    %v380 = vadd.f32 %v357, %v368
    %v381 = vadd.f32 %v358, %v368
    %v382 = vadd.f32 %v359, %v368
    %v383 = vadd.f32 %v360, %v368
    %v384 = vadd.f32 %v361, %v368
    %v385 = vadd.f32 %v362, %v368
    %v386 = vmax.f32 %v370, 0.0
    %v387 = vmax.f32 %v371, 0.0
    %v388 = vmax.f32 %v372, 0.0
    %v389 = vmax.f32 %v373, 0.0
    %v390 = vmax.f32 %v374, 0.0
    %v391 = vmax.f32 %v375, 0.0
    %v392 = vmax.f32 %v376, 0.0
    %v393 = vmax.f32 %v377, 0.0
    %v394 = vmax.f32 %v378, 0.0
    %v395 = vmax.f32 %v379, 0.0
    %v396 = vmax.f32 %v380, 0.0
    %v397 = vmax.f32 %v381, 0.0
    %v398 = vmax.f32 %v382, 0.0
    %v399 = vmax.f32 %v383, 0.0
    %v400 = vmax.f32 %v384, 0.0
    %v401 = vmax.f32 %v385, 0.0
    %402 = vst [vmem:[#allocation2] sm:$0xff] %v386
    %403 = vst [vmem:[#allocation2 + $0x8] sm:$0xff] %v387
    %404 = vst [vmem:[#allocation2 + $0x10] sm:$0xff] %v388
    %405 = vst [vmem:[#allocation2 + $0x18] sm:$0xff] %v389
    %406 = vst [vmem:[#allocation2 + $0x20] sm:$0xff] %v390
    %407 = vst [vmem:[#allocation2 + $0x28] sm:$0xff] %v391
    %408 = vst [vmem:[#allocation2 + $0x30] sm:$0xff] %v392
    %409 = vst [vmem:[#allocation2 + $0x38] sm:$0xff] %v393
    %410 = vst [vmem:[#allocation2 + $0x40] sm:$0xff] %v394
    %411 = vst [vmem:[#allocation2 + $0x48] sm:$0xff] %v395
    %412 = vst [vmem:[#allocation2 + $0x50] sm:$0xff] %v396
    %413 = vst [vmem:[#allocation2 + $0x58] sm:$0xff] %v397
    %414 = vst [vmem:[#allocation2 + $0x60] sm:$0xff] %v398
    %415 = vst [vmem:[#allocation2 + $0x68] sm:$0xff] %v399
    %416 = vst [vmem:[#allocation2 + $0x70] sm:$0xff] %v400
    %417 = vst [vmem:[#allocation2 + $0x78] sm:$0xff] %v401
    // Predicated region
    $region18: #{encoder_forward.7} parent=1 // pred_check
      _
    $region19: #{encoder_forward.7} parent=1 // pred_check_branch
      %419 = sbr.rel (0) target = $region21
    $region20: #{encoder_forward.7} parent=1 // pred_region
      %s421 = ssub.s32 2048, 2048
      %422 = vsyncadd [#allocation3], %s421
      %s423 = sshll.u32 [#allocation2], 4
      %s424 = int_to_ptr.vmem [resolvable:$true] %s423
      %429 = dma.vmem_to_hbm [thread:$0]  %s424, 2048, %s4, [#allocation3], 128, 128, 8
    $region21: #{encoder_forward.7} parent=1 // pred_fallthru
      _
    // Predicated region
    $region22: #{encoder_forward.7} parent=1 // pred_check
      _
    $region23: #{encoder_forward.7} parent=1 // pred_check_branch
      %431 = sbr.rel (0) target = $region25
    $region24: #{encoder_forward.7} parent=1 // pred_region
      %432 = dma.done [#allocation3], 2048
    $region25: #{encoder_forward.7} parent=1 // pred_fallthru
      _
    %433 = vsyncpa [#allocation3], 1

</llo_original>
